<compile_context>
chip_gen: v7x
topology: tpu7x:2x2x1
jax: 0.10.0
libtpu: 0.0.40
codegen_flags: <defaults>
</compile_context>

<pallas_src>
import jax
import jax.numpy as jnp
from jax.experimental import pallas as pl
from jax.experimental.pallas import tpu as pltpu

H = 768   # roberta-base hidden size (fixed by nn.Linear(768, ...))
A = 512   # attention MLP hidden size


def _tanh_in_bf16() -> bool:
    """bf16 EUP exists on v6e/v7x; v5e (and older) must keep the f32 tanh path."""
    try:
        kind = jax.devices()[0].device_kind.lower()
    except Exception:
        return False
    return ("v6" in kind) or ("v7" in kind)


def _pick_group_size(batch: int, max_tb: int = 8) -> int:
    """Largest TB <= max_tb dividing batch, preferring >= 2 grid steps (v7x megacore)."""
    divisors = [d for d in range(1, min(max_tb, batch) + 1) if batch % d == 0]
    good = [d for d in divisors if batch // d >= 2]
    return max(good) if good else max(divisors)


def _make_lit_head_kernel(tanh_in_bf16: bool):
    def kernel(h_ref, w1_ref, b1_ref, w2t_ref, b2_ref, wr_ref, br_ref, out_ref):
        """One group of TB batch elements per grid step.

        h_ref  : (TB, S, H) f32   last-layer hidden states for this group
        w1_ref : (H, A)     bf16  attention Linear #1 weight
        b1_ref : (1, A)     f32   attention Linear #1 bias
        w2t_ref: (1, A)     f32   attention Linear #2 weight, transposed
        b2_ref : (1, 1)     f32   attention Linear #2 bias
        wr_ref : (1, H)     f32   regressor weight, transposed
        br_ref : (1, 1)     f32   regressor bias
        out_ref: (TB, 1, 1) f32
        """
        TB, S, Hd = h_ref.shape
        Adim = w1_ref.shape[1]

        h = h_ref[...]                         # (TB, S, H), f32
        h2 = h.reshape(TB * S, Hd)             # free merge of leading dims

        # Single unpadded MXU pass: bf16 inputs (in-kernel cast), f32 accumulate.
        z = jnp.dot(h2.astype(jnp.bfloat16), w1_ref[...],
                    preferred_element_type=jnp.float32) + b1_ref[...]   # (TB*S, A)

        if tanh_in_bf16:
            # v6e/v7x: bf16 EUP halves occupancy of the single EUP slot.
            act = jnp.tanh(z.astype(jnp.bfloat16)).astype(jnp.float32)
        else:
            # v5e: no bf16 VPU/EUP, keep f32.
            act = jnp.tanh(z)
        a3 = act.reshape(TB, S, Adim)          # free split (S kept a multiple of 8)

        # Linear(512, 1) as VPU multiply + lane reduction (an N=1 MXU matmul
        # would use <1% of the output lanes).
        scores = jnp.sum(a3 * w2t_ref[...], axis=-1, keepdims=True) + b2_ref[...]  # (TB,S,1)

        # Softmax over the sequence dim (torch dim=1), per batch element,
        # numerically stable; denominator reciprocal on the EUP (approx, ~free).
        m = jnp.max(scores, axis=1, keepdims=True)                      # (TB,1,1)
        e = jnp.exp(scores - m)                                         # (TB,S,1)
        inv_denom = pl.reciprocal(jnp.sum(e, axis=1, keepdims=True), approx=True)
        weights = e * inv_denom                                         # (TB,S,1)

        # Regressor projection per token, f32 on the VPU: p[t,s] = h[t,s,:] . wr
        p = jnp.sum(h.astype(jnp.float32) * wr_ref[...], axis=-1, keepdims=True)   # (TB,S,1)

        # out[t] = sum_s weights[t,s] * p[t,s] + br
        #        == Linear(768,1)(sum_s weights[t,s] * h[t,s])   (same algebra as the module)
        out_ref[...] = jnp.sum(weights * p, axis=1, keepdims=True) + br_ref[...]

    return kernel


def prepare_lit_head_params(w1, b1, w2, b2, wr, br):
    """One-time weight prep (do this at weight-load time, not per forward call)."""
    return (
        w1.astype(jnp.bfloat16),                       # (H, A) bf16 (MXU operand)
        b1.reshape(1, A).astype(jnp.float32),          # (1, A)
        w2.reshape(1, A).astype(jnp.float32),          # (1, A) = w2.T
        b2.reshape(1, 1).astype(jnp.float32),          # (1, 1)
        wr.reshape(1, H).astype(jnp.float32),          # (1, H) = wr.T
        br.reshape(1, 1).astype(jnp.float32),          # (1, 1)
    )


def lit_model_head(hidden_states, params, *, max_tb=8):
    """Attention-pooling head + regressor on last-layer hidden states.

    hidden_states: (B, S, H) f32 (or bf16 straight from the backbone).
    params: output of prepare_lit_head_params. Returns (B, 1) float32.
    """
    w1, b1, w2t, b2, wr_row, br = params
    B, S, Hd = hidden_states.shape
    TB = _pick_group_size(B, max_tb)
    G = B // TB

    const = lambda g: (0, 0)
    out = pl.pallas_call(
        _make_lit_head_kernel(_tanh_in_bf16()),
        out_shape=jax.ShapeDtypeStruct((B, 1, 1), jnp.float32),
        grid=(G,),
        in_specs=[
            # One (TB, S, H) hidden block per step; softmax over S stays in-tile
            # (keep the block equal to full S; S should be a multiple of 8).
            pl.BlockSpec((TB, S, Hd), lambda g: (g, 0, 0)),
            # Weights: constant index maps -> fetched once, VMEM-resident across steps.
            pl.BlockSpec((Hd, A), const),
            pl.BlockSpec((1, A), const),
            pl.BlockSpec((1, A), const),
            pl.BlockSpec((1, 1), const),
            pl.BlockSpec((1, Hd), const),
            pl.BlockSpec((1, 1), const),
        ],
        # Per-step (TB,1,1) block: one contiguous 4*TB-byte writeback per step,
        # index map varies with g so the batch axis stays legal as "parallel".
        out_specs=pl.BlockSpec((TB, 1, 1), lambda g: (g, 0, 0)),
        compiler_params=pltpu.CompilerParams(
            dimension_semantics=("parallel",),   # shard batch groups across TCs (v7x)
            # Budgeted for TB=8, S=512 f32 hidden (2 x ~12.6 MiB) + weights; fits
            # under v7x's 64 MiB physical VMEM with headroom.
            vmem_limit_bytes=48 * 1024 * 1024,
        ),
    )(hidden_states, w1, b1, w2t, b2, wr_row, br)
    return out.reshape(B, 1)


if __name__ == "__main__":
    B, S = 4, 8  # small demo batch / sequence; H must stay 768 per the module

    key = jax.random.PRNGKey(0)
    k = jax.random.split(key, 7)
    hidden = jax.random.normal(k[0], (B, S, H), jnp.float32)
    # deterministic synthetic parameters (small init, like nn.Linear defaults scaled)
    w1 = jax.random.normal(k[1], (H, A), jnp.float32) * 0.02
    b1 = jax.random.normal(k[2], (1, A), jnp.float32) * 0.02
    w2 = jax.random.normal(k[3], (A, 1), jnp.float32) * 0.02
    b2 = jax.random.normal(k[4], (1, 1), jnp.float32) * 0.02
    wr = jax.random.normal(k[5], (H, 1), jnp.float32) * 0.02
    br = jax.random.normal(k[6], (1, 1), jnp.float32) * 0.02

    params = prepare_lit_head_params(w1, b1, w2, b2, wr, br)  # once, at load time
    out = lit_model_head(hidden, params)
    out = jax.block_until_ready(out)
    assert out.shape == (B, 1)

    # Reference 1: mirrors the kernel arithmetic (bf16 MXU inputs, f32 VPU p-path,
    # tanh dtype matching the device path). Tolerance covers the approx reciprocal.
    tanh_bf16 = _tanh_in_bf16()
    h2 = hidden.reshape(B * S, H)
    z = jnp.dot(h2.astype(jnp.bfloat16), w1.astype(jnp.bfloat16),
                preferred_element_type=jnp.float32) + b1
    a_ref = (jnp.tanh(z.astype(jnp.bfloat16)).astype(jnp.float32)
             if tanh_bf16 else jnp.tanh(z))
    s_ref = (jnp.sum(a_ref * w2.T, axis=-1, keepdims=True) + b2).reshape(B, S, 1)
    att = jax.nn.softmax(s_ref, axis=1)
    p_ref = jnp.sum(hidden * wr.reshape(1, 1, H), axis=-1, keepdims=True)  # (B,S,1) f32
    ref_kernel = jnp.sum(att * p_ref, axis=1) + br
    assert jnp.allclose(out, ref_kernel, atol=2e-3, rtol=2e-3), (out, ref_kernel)

    # Reference 2: original module arithmetic in full f32 (loose tolerance covers
    # the deliberate bf16 path through the attention MLP).
    a32 = jnp.tanh(h2 @ w1 + b1)
    s32 = (a32 @ w2 + b2).reshape(B, S, 1)
    att32 = jax.nn.softmax(s32, axis=1)
    ctx32 = jnp.sum(att32 * hidden, axis=1)
    ref_module = ctx32 @ wr + br
    assert jnp.allclose(out, ref_module, atol=5e-2, rtol=5e-2), (out, ref_module)

    print("KERNEL_OK")
</pallas_src>

<mosaic_0001>
module attributes {stable_mosaic.version = 11 : i64} {
  func.func @kernel(%arg0: i32, %arg1: memref<2x8x768xf32, #tpu.memory_space<vmem>>, %arg2: memref<768x512xbf16, #tpu.memory_space<vmem>>, %arg3: memref<1x512xf32, #tpu.memory_space<vmem>>, %arg4: memref<1x512xf32, #tpu.memory_space<vmem>>, %arg5: memref<1x1xf32, #tpu.memory_space<vmem>>, %arg6: memref<1x768xf32, #tpu.memory_space<vmem>>, %arg7: memref<1x1xf32, #tpu.memory_space<vmem>>, %arg8: memref<2x1x1xf32, #tpu.memory_space<vmem>>) attributes {dimension_semantics = [#tpu.dimension_semantics<parallel>], iteration_bounds = array<i64: 2>, scalar_prefetch = 0 : i64, scratch_operands = 0 : i64, tpu.core_type = #tpu.core_type<tc>, window_params = [{transform_indices = @transform_0, window_bounds = array<i64: 2, 8, 768>}, {pipeline_mode = #tpu.pipeline_mode<synchronous>, transform_indices = @transform_1, window_bounds = array<i64: 768, 512>}, {pipeline_mode = #tpu.pipeline_mode<synchronous>, transform_indices = @transform_2, window_bounds = array<i64: 1, 512>}, {pipeline_mode = #tpu.pipeline_mode<synchronous>, transform_indices = @transform_3, window_bounds = array<i64: 1, 512>}, {pipeline_mode = #tpu.pipeline_mode<synchronous>, transform_indices = @transform_4, window_bounds = array<i64: 1, 1>}, {pipeline_mode = #tpu.pipeline_mode<synchronous>, transform_indices = @transform_5, window_bounds = array<i64: 1, 768>}, {pipeline_mode = #tpu.pipeline_mode<synchronous>, transform_indices = @transform_6, window_bounds = array<i64: 1, 1>}, {transform_indices = @transform_7, window_bounds = array<i64: 2, 1, 1>}]} {
    %c0 = arith.constant 0 : index
    %c0_0 = arith.constant 0 : index
    %c0_1 = arith.constant 0 : index
    %0 = vector.load %arg1[%c0, %c0_0, %c0_1] : memref<2x8x768xf32, #tpu.memory_space<vmem>>, vector<2x8x768xf32>
    %1 = vector.shape_cast %0 : vector<2x8x768xf32> to vector<16x768xf32>
    %2 = arith.truncf %1 : vector<16x768xf32> to vector<16x768xbf16>
    %c0_2 = arith.constant 0 : index
    %c0_3 = arith.constant 0 : index
    %3 = vector.load %arg2[%c0_2, %c0_3] : memref<768x512xbf16, #tpu.memory_space<vmem>>, vector<768x512xbf16>
    %cst = arith.constant dense<0.000000e+00> : vector<16x512xf32>
    %4 = tpu.matmul %2, %3, %cst {dimension_numbers = #tpu.dot_dimension_numbers<[1], [0], [0], [1], [0, 0, 1, 1], [], []>} : vector<16x768xbf16>, vector<768x512xbf16>, vector<16x512xf32> -> vector<16x512xf32>
    %c0_4 = arith.constant 0 : index
    %c0_5 = arith.constant 0 : index
    %5 = vector.load %arg3[%c0_4, %c0_5] : memref<1x512xf32, #tpu.memory_space<vmem>>, vector<1x512xf32>
    %6 = vector.broadcast %5 : vector<1x512xf32> to vector<16x512xf32>
    %7 = arith.addf %4, %6 : vector<16x512xf32>
    %8 = math.tanh %7 : vector<16x512xf32>
    %9 = vector.shape_cast %8 : vector<16x512xf32> to vector<2x8x512xf32>
    %c0_6 = arith.constant 0 : index
    %c0_7 = arith.constant 0 : index
    %10 = vector.load %arg4[%c0_6, %c0_7] : memref<1x512xf32, #tpu.memory_space<vmem>>, vector<1x512xf32>
    %11 = vector.shape_cast %10 : vector<1x512xf32> to vector<1x1x512xf32>
    %12 = vector.broadcast %11 : vector<1x1x512xf32> to vector<2x8x512xf32>
    %13 = arith.mulf %9, %12 : vector<2x8x512xf32>
    %cst_8 = arith.constant dense<0.000000e+00> : vector<2x8xf32>
    %14 = vector.multi_reduction <add>, %13, %cst_8 [2] : vector<2x8x512xf32> to vector<2x8xf32>
    %15 = vector.shape_cast %14 : vector<2x8xf32> to vector<2x8x1xf32>
    %c0_9 = arith.constant 0 : index
    %c0_10 = arith.constant 0 : index
    %16 = vector.load %arg5[%c0_9, %c0_10] : memref<1x1xf32, #tpu.memory_space<vmem>>, vector<1x1xf32>
    %17 = vector.shape_cast %16 : vector<1x1xf32> to vector<1x1x1xf32>
    %18 = vector.broadcast %17 : vector<1x1x1xf32> to vector<2x8x1xf32>
    %19 = arith.addf %15, %18 : vector<2x8x1xf32>
    %cst_11 = arith.constant dense<0xFF800000> : vector<2x1xf32>
    %20 = vector.multi_reduction <maximumf>, %19, %cst_11 [1] : vector<2x8x1xf32> to vector<2x1xf32>
    %21 = vector.shape_cast %20 : vector<2x1xf32> to vector<2x1x1xf32>
    %22 = vector.broadcast %21 : vector<2x1x1xf32> to vector<2x8x1xf32>
    %23 = arith.subf %19, %22 : vector<2x8x1xf32>
    %24 = math.exp %23 : vector<2x8x1xf32>
    %cst_12 = arith.constant dense<0.000000e+00> : vector<2x1xf32>
    %25 = vector.multi_reduction <add>, %24, %cst_12 [1] : vector<2x8x1xf32> to vector<2x1xf32>
    %26 = vector.shape_cast %25 : vector<2x1xf32> to vector<2x1x1xf32>
    %27 = tpu.reciprocal %26 {approx = true} : vector<2x1x1xf32> -> vector<2x1x1xf32>
    %28 = vector.broadcast %27 : vector<2x1x1xf32> to vector<2x8x1xf32>
    %29 = arith.mulf %24, %28 : vector<2x8x1xf32>
    %c0_13 = arith.constant 0 : index
    %c0_14 = arith.constant 0 : index
    %30 = vector.load %arg6[%c0_13, %c0_14] : memref<1x768xf32, #tpu.memory_space<vmem>>, vector<1x768xf32>
    %31 = vector.shape_cast %30 : vector<1x768xf32> to vector<1x1x768xf32>
    %32 = vector.broadcast %31 : vector<1x1x768xf32> to vector<2x8x768xf32>
    %33 = arith.mulf %0, %32 : vector<2x8x768xf32>
    %cst_15 = arith.constant dense<0.000000e+00> : vector<2x8xf32>
    %34 = vector.multi_reduction <add>, %33, %cst_15 [2] : vector<2x8x768xf32> to vector<2x8xf32>
    %35 = vector.shape_cast %34 : vector<2x8xf32> to vector<2x8x1xf32>
    %36 = arith.mulf %29, %35 : vector<2x8x1xf32>
    %cst_16 = arith.constant dense<0.000000e+00> : vector<2x1xf32>
    %37 = vector.multi_reduction <add>, %36, %cst_16 [1] : vector<2x8x1xf32> to vector<2x1xf32>
    %38 = vector.shape_cast %37 : vector<2x1xf32> to vector<2x1x1xf32>
    %c0_17 = arith.constant 0 : index
    %c0_18 = arith.constant 0 : index
    %39 = vector.load %arg7[%c0_17, %c0_18] : memref<1x1xf32, #tpu.memory_space<vmem>>, vector<1x1xf32>
    %40 = vector.shape_cast %39 : vector<1x1xf32> to vector<1x1x1xf32>
    %41 = vector.broadcast %40 : vector<1x1x1xf32> to vector<2x1x1xf32>
    %42 = arith.addf %38, %41 : vector<2x1x1xf32>
    %c0_19 = arith.constant 0 : index
    %c0_20 = arith.constant 0 : index
    %c0_21 = arith.constant 0 : index
    %43 = vector.load %arg8[%c0_19, %c0_20, %c0_21] : memref<2x1x1xf32, #tpu.memory_space<vmem>>, vector<2x1x1xf32>
    tpu.vector_store %arg8[%c0_19, %c0_20, %c0_21], %42 {strides = array<i32>} : memref<2x1x1xf32, #tpu.memory_space<vmem>>, vector<2x1x1xf32>,
    return
  }
  func.func @transform_0(%arg0: i32) -> (i32, i32, i32) {
    %c0_i32 = arith.constant 0 : i32
    %c0_i32_0 = arith.constant 0 : i32
    %c0_i32_1 = arith.constant 0 : i32
    return %arg0, %c0_i32, %c0_i32_0 : i32, i32, i32
  }
  func.func @transform_1(%arg0: i32) -> (i32, i32) {
    %c0_i32 = arith.constant 0 : i32
    %c0_i32_0 = arith.constant 0 : i32
    %c0_i32_1 = arith.constant 0 : i32
    return %c0_i32, %c0_i32_0 : i32, i32
  }
  func.func @transform_2(%arg0: i32) -> (i32, i32) {
    %c0_i32 = arith.constant 0 : i32
    %c0_i32_0 = arith.constant 0 : i32
    %c0_i32_1 = arith.constant 0 : i32
    return %c0_i32, %c0_i32_0 : i32, i32
  }
  func.func @transform_3(%arg0: i32) -> (i32, i32) {
    %c0_i32 = arith.constant 0 : i32
    %c0_i32_0 = arith.constant 0 : i32
    %c0_i32_1 = arith.constant 0 : i32
    return %c0_i32, %c0_i32_0 : i32, i32
  }
  func.func @transform_4(%arg0: i32) -> (i32, i32) {
    %c0_i32 = arith.constant 0 : i32
    %c0_i32_0 = arith.constant 0 : i32
    %c0_i32_1 = arith.constant 0 : i32
    return %c0_i32, %c0_i32_0 : i32, i32
  }
  func.func @transform_5(%arg0: i32) -> (i32, i32) {
    %c0_i32 = arith.constant 0 : i32
    %c0_i32_0 = arith.constant 0 : i32
    %c0_i32_1 = arith.constant 0 : i32
    return %c0_i32, %c0_i32_0 : i32, i32
  }
  func.func @transform_6(%arg0: i32) -> (i32, i32) {
    %c0_i32 = arith.constant 0 : i32
    %c0_i32_0 = arith.constant 0 : i32
    %c0_i32_1 = arith.constant 0 : i32
    return %c0_i32, %c0_i32_0 : i32, i32
  }
  func.func @transform_7(%arg0: i32) -> (i32, i32, i32) {
    %c0_i32 = arith.constant 0 : i32
    %c0_i32_0 = arith.constant 0 : i32
    %c0_i32_1 = arith.constant 0 : i32
    return %arg0, %c0_i32, %c0_i32_0 : i32, i32, i32
  }
}

</mosaic_0001>

<llo_original>
// kernel: tpu_custom_call.1
$region0: #{tpu_custom_call.1}
  #allocation0 [shape = 'u32[]', space=smem, size = 0x4, offset = 0x4, fixed_abs, tag = 'smem constant byte address 0x4 - core index']
  #allocation1 [shape = 'u32[144,128]{1,0:T(1,128)}', space=vmem, size = 0x12000, scoped, tag = 'internal scratch']
  #allocation2 [shape = 'f32[1,1]{1,0:T(1,128)S(1)}', space=vmem, size = 0x200, scoped, tag = 'scoped memory for tpu_custom_call.1']
  #allocation3 [shape = 'f32[1,1]{1,0:T(1,128)S(1)}', space=vmem, size = 0x200, scoped, tag = 'scoped memory for tpu_custom_call.1']
  %s0 = inlined_call_operand.hbm [shape: f32[4,8,768], index: 0, kind: input, shape index: {}]
  %s1 = inlined_call_operand.hbm [shape: bf16[768,512], index: 1, kind: input, shape index: {}]
  %s2 = inlined_call_operand.vmem [shape: f32[1,512], index: 2, kind: input, shape index: {}]
  %s3 = inlined_call_operand.vmem [shape: f32[1,512], index: 3, kind: input, shape index: {}]
  %s4 = inlined_call_operand.<no memory space> [shape: f32[1,1], index: 4, kind: input, shape index: {}]
  %s5 = inlined_call_operand.vmem [shape: f32[1,768], index: 5, kind: input, shape index: {}]
  %s6 = inlined_call_operand.<no memory space> [shape: f32[1,1], index: 6, kind: input, shape index: {}]
  %s7 = inlined_call_operand.vmem [shape: f32[4,1,1], index: 7, kind: output, shape index: {}]
  %s8 = sld [smem:[#allocation0]]
  $region69: #{tpu_custom_call.1} parent=0
    _
  %s10 = ssub.s32 1, %s8
  %s11 = scalar_select 0, %s10, %s8
  %v12 = vstv %s4
  %13 = vst [vmem:[#allocation2] sm:$0x1] %v12
  %v14 = vstv %s6
  %15 = vst [vmem:[#allocation3] sm:$0x1] %v14
  $region1: #{tpu_custom_call.1} parent=0
    #allocation4 [shape = 'u8[98304]{0}', space=vmem, size = 0x18000, scoped, tag = 'input window, operand 0']
    #allocation5 [shape = 's32[2]{0}', space=sflag, size = 0x8, scoped, tag = 'scoped memory for tpu_custom_call.1']
    #allocation6 [shape = 'u8[786432]{0}', space=vmem, size = 0xc0000, scoped, tag = 'input window, operand 1, single buffered']
    #allocation7 [shape = 's32[1]{0}', space=sflag, size = 0x4, scoped, tag = 'scoped memory for tpu_custom_call.1']
    %16 = vsyncpa [#allocation5], 0
    %s17 = scalar_lea.sflag [#allocation5], 1
    %18 = vsyncpa %s17, 0
    %19 = vsyncpa [#allocation7], 0
    loop: start=0, step=1, limit=4
    $region2: #{tpu_custom_call.1} parent=1 // loop_pre_header
      _
    $region3: #{tpu_custom_call.1} parent=1 // loop_header
      %s21 = sphi 0, %s25
      %p22 = scmp.ge.s32.totalorder %s21, 4
      %s31 = sphi 0, %s33
      %s34 = sphi 0, %s31
      %s35 = sphi 0, %s34
      %s51 = sphi 0, %s35
      %s55 = sphi 0, %s55
      %s57 = sphi 0, %s55
      %s58 = sphi 0, %s57
      %s72 = sphi 0, %s58
      %s76 = sphi 0, %s76
      %s78 = sphi 0, %s76
      %s79 = sphi 0, %s78
      %s93 = sphi 0, %s79
      %s97 = sphi 0, %s97
      %s99 = sphi 0, %s97
      %s100 = sphi 0, %s99
      %s114 = sphi 0, %s100
      %s118 = sphi 0, %s118
      %s120 = sphi 0, %s118
      %s121 = sphi 0, %s120
      %s135 = sphi 0, %s121
      %s139 = sphi 0, %s139
      %s141 = sphi 0, %s139
      %s142 = sphi 0, %s141
      %s156 = sphi 0, %s142
      %s160 = sphi 0, %s160
      %s162 = sphi 0, %s160
      %s163 = sphi 0, %s162
      %s177 = sphi 0, %s163
      %s183 = sphi 0, %s185
      %s186 = sphi 0, %s183
      %s187 = sphi 0, %s186
      %s203 = sphi 0, %s187
    $region4: #{tpu_custom_call.1} parent=1 // loop_header_branch
      %24 = sbr.rel (%p22) target = $region8
    $region5: #{tpu_custom_call.1} parent=1 // loop_body
      %s26 = ssub.s32 %s21, 1
      %s27 = ssub.s32 %s21, 2
      %s28 = sadd.s32 %s21, 1
      %s29 = ssub.s32 %s21, %s28
      %p30 = scmp.eq.s32.totalorder %s29, 0
      %s32 = sadd.s32 %s31, 1
      %s33 = scalar_select %p30, %s31, %s32
      %p36 = pneg %p30
      %p37 = scmp.eq.s32.totalorder %s21, 1
      %p38 = por %p36, %p37
      %p39 = scmp.ne.s32.totalorder %s31, %s34
      %p40 = scmp.eq.s32.totalorder %s21, 0
      %p41 = por %p39, %p40
      %p42 = scmp.ne.s32.totalorder %s31, %s34
      %p43 = scmp.eq.s32.totalorder %s26, 1
      %p44 = por %p42, %p43
      %p45 = scmp.ne.s32.totalorder %s34, %s35
      %p46 = scmp.eq.s32.totalorder %s26, 0
      %p47 = por %p45, %p46
      %p48 = scmp.ne.s32.totalorder %s34, %s35
      %p49 = scmp.eq.s32.totalorder %s27, 1
      %p50 = por %p48, %p49
      %p52 = scmp.ne.s32.totalorder %s35, %s51
      %p53 = scmp.eq.s32.totalorder %s27, 0
      %p54 = por %p52, %p53
      %s56 = sadd.s32 %s55, 1
      %p59 = scmp.eq.s32.totalorder %s21, 1
      %p60 = scmp.ne.s32.totalorder %s55, %s57
      %p61 = scmp.eq.s32.totalorder %s21, 0
      %p62 = por %p60, %p61
      %p63 = scmp.ne.s32.totalorder %s55, %s57
      %p64 = scmp.eq.s32.totalorder %s26, 1
      %p65 = por %p63, %p64
      %p66 = scmp.ne.s32.totalorder %s57, %s58
      %p67 = scmp.eq.s32.totalorder %s26, 0
      %p68 = por %p66, %p67
      %p69 = scmp.ne.s32.totalorder %s57, %s58
      %p70 = scmp.eq.s32.totalorder %s27, 1
      %p71 = por %p69, %p70
      %p73 = scmp.ne.s32.totalorder %s58, %s72
      %p74 = scmp.eq.s32.totalorder %s27, 0
      %p75 = por %p73, %p74
      %s77 = sadd.s32 %s76, 1
      %p80 = scmp.eq.s32.totalorder %s21, 1
      %p81 = scmp.ne.s32.totalorder %s76, %s78
      %p82 = scmp.eq.s32.totalorder %s21, 0
      %p83 = por %p81, %p82
      %p84 = scmp.ne.s32.totalorder %s76, %s78
      %p85 = scmp.eq.s32.totalorder %s26, 1
      %p86 = por %p84, %p85
      %p87 = scmp.ne.s32.totalorder %s78, %s79
      %p88 = scmp.eq.s32.totalorder %s26, 0
      %p89 = por %p87, %p88
      %p90 = scmp.ne.s32.totalorder %s78, %s79
      %p91 = scmp.eq.s32.totalorder %s27, 1
      %p92 = por %p90, %p91
      %p94 = scmp.ne.s32.totalorder %s79, %s93
      %p95 = scmp.eq.s32.totalorder %s27, 0
      %p96 = por %p94, %p95
      %s98 = sadd.s32 %s97, 1
      %p101 = scmp.eq.s32.totalorder %s21, 1
      %p102 = scmp.ne.s32.totalorder %s97, %s99
      %p103 = scmp.eq.s32.totalorder %s21, 0
      %p104 = por %p102, %p103
      %p105 = scmp.ne.s32.totalorder %s97, %s99
      %p106 = scmp.eq.s32.totalorder %s26, 1
      %p107 = por %p105, %p106
      %p108 = scmp.ne.s32.totalorder %s99, %s100
      %p109 = scmp.eq.s32.totalorder %s26, 0
      %p110 = por %p108, %p109
      %p111 = scmp.ne.s32.totalorder %s99, %s100
      %p112 = scmp.eq.s32.totalorder %s27, 1
      %p113 = por %p111, %p112
      %p115 = scmp.ne.s32.totalorder %s100, %s114
      %p116 = scmp.eq.s32.totalorder %s27, 0
      %p117 = por %p115, %p116
      %s119 = sadd.s32 %s118, 1
      %p122 = scmp.eq.s32.totalorder %s21, 1
      %p123 = scmp.ne.s32.totalorder %s118, %s120
      %p124 = scmp.eq.s32.totalorder %s21, 0
      %p125 = por %p123, %p124
      %p126 = scmp.ne.s32.totalorder %s118, %s120
      %p127 = scmp.eq.s32.totalorder %s26, 1
      %p128 = por %p126, %p127
      %p129 = scmp.ne.s32.totalorder %s120, %s121
      %p130 = scmp.eq.s32.totalorder %s26, 0
      %p131 = por %p129, %p130
      %p132 = scmp.ne.s32.totalorder %s120, %s121
      %p133 = scmp.eq.s32.totalorder %s27, 1
      %p134 = por %p132, %p133
      %p136 = scmp.ne.s32.totalorder %s121, %s135
      %p137 = scmp.eq.s32.totalorder %s27, 0
      %p138 = por %p136, %p137
      %s140 = sadd.s32 %s139, 1
      %p143 = scmp.eq.s32.totalorder %s21, 1
      %p144 = scmp.ne.s32.totalorder %s139, %s141
      %p145 = scmp.eq.s32.totalorder %s21, 0
      %p146 = por %p144, %p145
      %p147 = scmp.ne.s32.totalorder %s139, %s141
      %p148 = scmp.eq.s32.totalorder %s26, 1
      %p149 = por %p147, %p148
      %p150 = scmp.ne.s32.totalorder %s141, %s142
      %p151 = scmp.eq.s32.totalorder %s26, 0
      %p152 = por %p150, %p151
      %p153 = scmp.ne.s32.totalorder %s141, %s142
      %p154 = scmp.eq.s32.totalorder %s27, 1
      %p155 = por %p153, %p154
      %p157 = scmp.ne.s32.totalorder %s142, %s156
      %p158 = scmp.eq.s32.totalorder %s27, 0
      %p159 = por %p157, %p158
      %s161 = sadd.s32 %s160, 1
      %p164 = scmp.eq.s32.totalorder %s21, 1
      %p165 = scmp.ne.s32.totalorder %s160, %s162
      %p166 = scmp.eq.s32.totalorder %s21, 0
      %p167 = por %p165, %p166
      %p168 = scmp.ne.s32.totalorder %s160, %s162
      %p169 = scmp.eq.s32.totalorder %s26, 1
      %p170 = por %p168, %p169
      %p171 = scmp.ne.s32.totalorder %s162, %s163
      %p172 = scmp.eq.s32.totalorder %s26, 0
      %p173 = por %p171, %p172
      %p174 = scmp.ne.s32.totalorder %s162, %s163
      %p175 = scmp.eq.s32.totalorder %s27, 1
      %p176 = por %p174, %p175
      %p178 = scmp.ne.s32.totalorder %s163, %s177
      %p179 = scmp.eq.s32.totalorder %s27, 0
      %p180 = por %p178, %p179
      %s181 = ssub.s32 %s21, %s28
      %p182 = scmp.eq.s32.totalorder %s181, 0
      %s184 = sadd.s32 %s183, 1
      %s185 = scalar_select %p182, %s183, %s184
      %p188 = pneg %p182
      %p189 = scmp.eq.s32.totalorder %s21, 1
      %p190 = por %p188, %p189
      %p191 = scmp.ne.s32.totalorder %s183, %s186
      %p192 = scmp.eq.s32.totalorder %s21, 0
      %p193 = por %p191, %p192
      %p194 = scmp.ne.s32.totalorder %s183, %s186
      %p195 = scmp.eq.s32.totalorder %s26, 1
      %p196 = por %p194, %p195
      %p197 = scmp.ne.s32.totalorder %s186, %s187
      %p198 = scmp.eq.s32.totalorder %s26, 0
      %p199 = por %p197, %p198
      %p200 = scmp.ne.s32.totalorder %s186, %s187
      %p201 = scmp.eq.s32.totalorder %s27, 1
      %p202 = por %p200, %p201
      %p204 = scmp.ne.s32.totalorder %s187, %s203
      %p205 = scmp.eq.s32.totalorder %s27, 0
      %p206 = por %p204, %p205
      %p207 = scmp.le.s32.totalorder 1, %s21
      %p208 = scmp.lt.s32.totalorder %s21, 3
      %p209 = pnand %p207, %p208
      %p210 = pneg %p209
      // Predicated region
      $region9: #{tpu_custom_call.1} parent=5 // pred_check
        _
      $region10: #{tpu_custom_call.1} parent=5 // pred_check_branch
        %212 = sbr.rel (%p209) target = $region12
      $region11: #{tpu_custom_call.1} parent=5 // pred_region
        %s213 = ssub.s32 %s21, 1
        // Predicated region
        $region13: #{tpu_custom_call.1} parent=11 // pred_check
          %p214 = pneg %p68
        $region14: #{tpu_custom_call.1} parent=11 // pred_check_branch
          %216 = sbr.rel (%p214) target = $region16
        $region15: #{tpu_custom_call.1} parent=11 // pred_region
          %s218 = ssub.s32 24576, 24576
          %219 = vsyncadd [#allocation7], %s218
          %s220 = sshll.u32 [#allocation6], 4
          %s221 = int_to_ptr.vmem [resolvable:$true] %s220
          %226 = dma.hbm_to_vmem [thread:$0]  %s1, 24576, %s221, [#allocation7], 256, 256, 16
        $region16: #{tpu_custom_call.1} parent=11 // pred_fallthru
          _
        // Predicated region
        $region17: #{tpu_custom_call.1} parent=11 // pred_check
          %p227 = pneg %p89
        $region18: #{tpu_custom_call.1} parent=11 // pred_check_branch
          %229 = sbr.rel (%p227) target = $region20
        $region19: #{tpu_custom_call.1} parent=11 // pred_region
          _
        $region20: #{tpu_custom_call.1} parent=11 // pred_fallthru
          _
        // Predicated region
        $region21: #{tpu_custom_call.1} parent=11 // pred_check
          %p230 = pneg %p110
        $region22: #{tpu_custom_call.1} parent=11 // pred_check_branch
          %232 = sbr.rel (%p230) target = $region24
        $region23: #{tpu_custom_call.1} parent=11 // pred_region
          _
        $region24: #{tpu_custom_call.1} parent=11 // pred_fallthru
          _
        // Predicated region
        $region25: #{tpu_custom_call.1} parent=11 // pred_check
          %p233 = pneg %p131
        $region26: #{tpu_custom_call.1} parent=11 // pred_check_branch
          %235 = sbr.rel (%p233) target = $region28
        $region27: #{tpu_custom_call.1} parent=11 // pred_region
          _
        $region28: #{tpu_custom_call.1} parent=11 // pred_fallthru
          _
        // Predicated region
        $region29: #{tpu_custom_call.1} parent=11 // pred_check
          %p236 = pneg %p152
        $region30: #{tpu_custom_call.1} parent=11 // pred_check_branch
          %238 = sbr.rel (%p236) target = $region32
        $region31: #{tpu_custom_call.1} parent=11 // pred_region
          _
        $region32: #{tpu_custom_call.1} parent=11 // pred_fallthru
          _
        // Predicated region
        $region33: #{tpu_custom_call.1} parent=11 // pred_check
          %p239 = pneg %p173
        $region34: #{tpu_custom_call.1} parent=11 // pred_check_branch
          %241 = sbr.rel (%p239) target = $region36
        $region35: #{tpu_custom_call.1} parent=11 // pred_region
          _
        $region36: #{tpu_custom_call.1} parent=11 // pred_fallthru
          _
      $region12: #{tpu_custom_call.1} parent=5 // pred_fallthru
        _
      %p242 = scmp.lt.s32.totalorder %s21, 2
      // Predicated region
      $region37: #{tpu_custom_call.1} parent=5 // pred_check
        %p243 = pneg %p242
      $region38: #{tpu_custom_call.1} parent=5 // pred_check_branch
        %245 = sbr.rel (%p243) target = $region40
      $region39: #{tpu_custom_call.1} parent=5 // pred_region
        // Predicated region
        $region41: #{tpu_custom_call.1} parent=39 // pred_check
          %p246 = pneg %p41
        $region42: #{tpu_custom_call.1} parent=39 // pred_check_branch
          %248 = sbr.rel (%p246) target = $region44
        $region43: #{tpu_custom_call.1} parent=39 // pred_region
          %s249 = sand.u32 %s31, 1
          %s250 = scalar_lea.sflag [#allocation5], %s249
          %s251 = sand.u32 %s31, 1
          %s252 = smul.addr %s251, 96
          %s253 = scalar_lea.vmem [#allocation4], %s252
          %s254 = smul.u32 2, %s21
          %s256 = ssub.s32 1536, 1536
          %257 = vsyncadd %s250, %s256
          %s258 = smul.addr %s254, 6
          %s259 = smul.addr %s258, 128
          %s260 = scalar_lea.hbm %s0, %s259
          %s261 = sshll.u32 %s253, 4
          %s262 = int_to_ptr.vmem [resolvable:$true] %s261
          %267 = dma.hbm_to_vmem [thread:$0]  %s260, 1536, %s262, %s250, 768, 768, 48
        $region44: #{tpu_custom_call.1} parent=39 // pred_fallthru
          _
      $region40: #{tpu_custom_call.1} parent=5 // pred_fallthru
        _
      %p268 = scmp.le.s32.totalorder 1, %s21
      %p269 = scmp.lt.s32.totalorder %s21, 3
      %p270 = pnand %p268, %p269
      %p271 = pneg %p270
      // Predicated region
      $region45: #{tpu_custom_call.1} parent=5 // pred_check
        _
      $region46: #{tpu_custom_call.1} parent=5 // pred_check_branch
        %273 = sbr.rel (%p270) target = $region48
      $region47: #{tpu_custom_call.1} parent=5 // pred_region
        %s274 = ssub.s32 %s21, 1
        %s275 = sand.u32 %s34, 1
        %s276 = scalar_lea.sflag [#allocation5], %s275
        %s277 = sand.u32 %s34, 1
        %s278 = smul.addr %s277, 96
        %s279 = scalar_lea.vmem [#allocation4], %s278
        // Predicated region
        $region49: #{tpu_custom_call.1} parent=47 // pred_check
          %p280 = pneg %p47
        $region50: #{tpu_custom_call.1} parent=47 // pred_check_branch
          %282 = sbr.rel (%p280) target = $region52
        $region51: #{tpu_custom_call.1} parent=47 // pred_region
          %283 = dma.done %s276, 1536
        $region52: #{tpu_custom_call.1} parent=47 // pred_fallthru
          _
        // Predicated region
        $region53: #{tpu_custom_call.1} parent=47 // pred_check
          %p284 = pneg %p68
        $region54: #{tpu_custom_call.1} parent=47 // pred_check_branch
          %286 = sbr.rel (%p284) target = $region56
        $region55: #{tpu_custom_call.1} parent=47 // pred_region
          %287 = dma.done [#allocation7], 24576
        $region56: #{tpu_custom_call.1} parent=47 // pred_fallthru
          _
        %s288 = sand.u32 %s34, 1
        %s289 = scalar_lea.sflag [#allocation5], %s288
        %s290 = sand.u32 %s34, 1
        %s291 = smul.addr %s290, 96
        %s292 = scalar_lea.vmem [#allocation4], %s291
        %p293 = pneg %p47
        %p294 = pneg %p44
        %p295 = pneg %p68
        %p296 = pneg %p65
        %p297 = pneg %p89
        %p298 = pneg %p86
        %p299 = pneg %p110
        %p300 = pneg %p107
        %p301 = pneg %p131
        %p302 = pneg %p128
        %p303 = pneg %p152
        %p304 = pneg %p149
        %p305 = pneg %p173
        %p306 = pneg %p170
        %p307 = pneg %p199
        %p308 = pneg %p196
        %s309 = smul.u32 2, %s26
        %p310 = scmp.lt.s32.totalorder %s309, 3
        %s311 = scalar_select %p310, %s309, 3
        %s312 = scalar_lea.vmem %s7, %s311
        %s313 = smul.u32 2, %s26
        %s314 = smul.u32 2, %s26
        %p315 = scmp.lt.s32.totalorder %s314, 3
        %s316 = scalar_select %p315, %s314, 3
        %s317 = scalar_lea.vmem %s7, %s316
        %s318 = smul.u32 2, %s26
        %v319 = vld [vmem:[%s279] sm:$0xff]
        %v320 = vld [vmem:[%s279 + $0x8] sm:$0xff]
        %v321 = vld [vmem:[%s279 + $0x10] sm:$0xff]
        %v322 = vld [vmem:[%s279 + $0x18] sm:$0xff]
        %v323 = vld [vmem:[%s279 + $0x20] sm:$0xff]
        %v324 = vld [vmem:[%s279 + $0x28] sm:$0xff]
        %v325 = vld [vmem:[%s279 + $0x30] sm:$0xff]
        %v326 = vld [vmem:[%s279 + $0x38] sm:$0xff]
        %v327 = vld [vmem:[%s279 + $0x40] sm:$0xff]
        %v328 = vld [vmem:[%s279 + $0x48] sm:$0xff]
        %v329 = vld [vmem:[%s279 + $0x50] sm:$0xff]
        %v330 = vld [vmem:[%s279 + $0x58] sm:$0xff]
        %v331 = vpack.c.bf16 %v325, %v319
        %v332 = vpack.c.bf16 %v326, %v320
        %v333 = vpack.c.bf16 %v327, %v321
        %v334 = vpack.c.bf16 %v328, %v322
        %v335 = vpack.c.bf16 %v329, %v323
        %v336 = vpack.c.bf16 %v330, %v324
        %v337 = vld [vmem:[#allocation6] sm:$0xff]
        %v338 = vld [vmem:[#allocation6 + $0x8] sm:$0xff]
        %v339 = vld [vmem:[#allocation6 + $0x10] sm:$0xff]
        %v340 = vld [vmem:[#allocation6 + $0x18] sm:$0xff]
        %v341 = vld [vmem:[#allocation6 + $0x20] sm:$0xff]
        %v342 = vld [vmem:[#allocation6 + $0x28] sm:$0xff]
        %v343 = vld [vmem:[#allocation6 + $0x30] sm:$0xff]
        %v344 = vld [vmem:[#allocation6 + $0x38] sm:$0xff]
        %v345 = vld [vmem:[#allocation6 + $0x40] sm:$0xff]
        %v346 = vld [vmem:[#allocation6 + $0x48] sm:$0xff]
        %v347 = vld [vmem:[#allocation6 + $0x50] sm:$0xff]
        %v348 = vld [vmem:[#allocation6 + $0x58] sm:$0xff]
        %v349 = vld [vmem:[#allocation6 + $0x60] sm:$0xff]
        %v350 = vld [vmem:[#allocation6 + $0x68] sm:$0xff]
        %v351 = vld [vmem:[#allocation6 + $0x70] sm:$0xff]
        %v352 = vld [vmem:[#allocation6 + $0x78] sm:$0xff]
        %v353 = vld [vmem:[#allocation6 + $0x80] sm:$0xff]
        %v354 = vld [vmem:[#allocation6 + $0x88] sm:$0xff]
        %v355 = vld [vmem:[#allocation6 + $0x90] sm:$0xff]
        %v356 = vld [vmem:[#allocation6 + $0x98] sm:$0xff]
        %v357 = vld [vmem:[#allocation6 + $0xa0] sm:$0xff]
        %v358 = vld [vmem:[#allocation6 + $0xa8] sm:$0xff]
        %v359 = vld [vmem:[#allocation6 + $0xb0] sm:$0xff]
        %v360 = vld [vmem:[#allocation6 + $0xb8] sm:$0xff]
        %v361 = vld [vmem:[#allocation6 + $0xc0] sm:$0xff]
        %v362 = vld [vmem:[#allocation6 + $0xc8] sm:$0xff]
        %v363 = vld [vmem:[#allocation6 + $0xd0] sm:$0xff]
        %v364 = vld [vmem:[#allocation6 + $0xd8] sm:$0xff]
        %v365 = vld [vmem:[#allocation6 + $0xe0] sm:$0xff]
        %v366 = vld [vmem:[#allocation6 + $0xe8] sm:$0xff]
        %v367 = vld [vmem:[#allocation6 + $0xf0] sm:$0xff]
        %v368 = vld [vmem:[#allocation6 + $0xf8] sm:$0xff]
        %v369 = vld [vmem:[#allocation6 + $0x100] sm:$0xff]
        %v370 = vld [vmem:[#allocation6 + $0x108] sm:$0xff]
        %v371 = vld [vmem:[#allocation6 + $0x110] sm:$0xff]
        %v372 = vld [vmem:[#allocation6 + $0x118] sm:$0xff]
        %v373 = vld [vmem:[#allocation6 + $0x120] sm:$0xff]
        %v374 = vld [vmem:[#allocation6 + $0x128] sm:$0xff]
        %v375 = vld [vmem:[#allocation6 + $0x130] sm:$0xff]
        %v376 = vld [vmem:[#allocation6 + $0x138] sm:$0xff]
        %v377 = vld [vmem:[#allocation6 + $0x140] sm:$0xff]
        %v378 = vld [vmem:[#allocation6 + $0x148] sm:$0xff]
        %v379 = vld [vmem:[#allocation6 + $0x150] sm:$0xff]
        %v380 = vld [vmem:[#allocation6 + $0x158] sm:$0xff]
        %v381 = vld [vmem:[#allocation6 + $0x160] sm:$0xff]
        %v382 = vld [vmem:[#allocation6 + $0x168] sm:$0xff]
        %v383 = vld [vmem:[#allocation6 + $0x170] sm:$0xff]
        %v384 = vld [vmem:[#allocation6 + $0x178] sm:$0xff]
        %v385 = vld [vmem:[#allocation6 + $0x180] sm:$0xff]
        %v386 = vld [vmem:[#allocation6 + $0x188] sm:$0xff]
        %v387 = vld [vmem:[#allocation6 + $0x190] sm:$0xff]
        %v388 = vld [vmem:[#allocation6 + $0x198] sm:$0xff]
        %v389 = vld [vmem:[#allocation6 + $0x1a0] sm:$0xff]
        %v390 = vld [vmem:[#allocation6 + $0x1a8] sm:$0xff]
        %v391 = vld [vmem:[#allocation6 + $0x1b0] sm:$0xff]
        %v392 = vld [vmem:[#allocation6 + $0x1b8] sm:$0xff]
        %v393 = vld [vmem:[#allocation6 + $0x1c0] sm:$0xff]
        %v394 = vld [vmem:[#allocation6 + $0x1c8] sm:$0xff]
        %v395 = vld [vmem:[#allocation6 + $0x1d0] sm:$0xff]
        %v396 = vld [vmem:[#allocation6 + $0x1d8] sm:$0xff]
        %v397 = vld [vmem:[#allocation6 + $0x1e0] sm:$0xff]
        %v398 = vld [vmem:[#allocation6 + $0x1e8] sm:$0xff]
        %v399 = vld [vmem:[#allocation6 + $0x1f0] sm:$0xff]
        %v400 = vld [vmem:[#allocation6 + $0x1f8] sm:$0xff]
        %v401 = vld [vmem:[#allocation6 + $0x200] sm:$0xff]
        %v402 = vld [vmem:[#allocation6 + $0x208] sm:$0xff]
        %v403 = vld [vmem:[#allocation6 + $0x210] sm:$0xff]
        %v404 = vld [vmem:[#allocation6 + $0x218] sm:$0xff]
        %v405 = vld [vmem:[#allocation6 + $0x220] sm:$0xff]
        %v406 = vld [vmem:[#allocation6 + $0x228] sm:$0xff]
        %v407 = vld [vmem:[#allocation6 + $0x230] sm:$0xff]
        %v408 = vld [vmem:[#allocation6 + $0x238] sm:$0xff]
        %v409 = vld [vmem:[#allocation6 + $0x240] sm:$0xff]
        %v410 = vld [vmem:[#allocation6 + $0x248] sm:$0xff]
        %v411 = vld [vmem:[#allocation6 + $0x250] sm:$0xff]
        %v412 = vld [vmem:[#allocation6 + $0x258] sm:$0xff]
        %v413 = vld [vmem:[#allocation6 + $0x260] sm:$0xff]
        %v414 = vld [vmem:[#allocation6 + $0x268] sm:$0xff]
        %v415 = vld [vmem:[#allocation6 + $0x270] sm:$0xff]
        %v416 = vld [vmem:[#allocation6 + $0x278] sm:$0xff]
        %v417 = vld [vmem:[#allocation6 + $0x280] sm:$0xff]
        %v418 = vld [vmem:[#allocation6 + $0x288] sm:$0xff]
        %v419 = vld [vmem:[#allocation6 + $0x290] sm:$0xff]
        %v420 = vld [vmem:[#allocation6 + $0x298] sm:$0xff]
        %v421 = vld [vmem:[#allocation6 + $0x2a0] sm:$0xff]
        %v422 = vld [vmem:[#allocation6 + $0x2a8] sm:$0xff]
        %v423 = vld [vmem:[#allocation6 + $0x2b0] sm:$0xff]
        %v424 = vld [vmem:[#allocation6 + $0x2b8] sm:$0xff]
        %v425 = vld [vmem:[#allocation6 + $0x2c0] sm:$0xff]
        %v426 = vld [vmem:[#allocation6 + $0x2c8] sm:$0xff]
        %v427 = vld [vmem:[#allocation6 + $0x2d0] sm:$0xff]
        %v428 = vld [vmem:[#allocation6 + $0x2d8] sm:$0xff]
        %v429 = vld [vmem:[#allocation6 + $0x2e0] sm:$0xff]
        %v430 = vld [vmem:[#allocation6 + $0x2e8] sm:$0xff]
        %v431 = vld [vmem:[#allocation6 + $0x2f0] sm:$0xff]
        %v432 = vld [vmem:[#allocation6 + $0x2f8] sm:$0xff]
        %v433 = vld [vmem:[#allocation6 + $0x300] sm:$0xff]
        %v434 = vld [vmem:[#allocation6 + $0x308] sm:$0xff]
        %v435 = vld [vmem:[#allocation6 + $0x310] sm:$0xff]
        %v436 = vld [vmem:[#allocation6 + $0x318] sm:$0xff]
        %v437 = vld [vmem:[#allocation6 + $0x320] sm:$0xff]
        %v438 = vld [vmem:[#allocation6 + $0x328] sm:$0xff]
        %v439 = vld [vmem:[#allocation6 + $0x330] sm:$0xff]
        %v440 = vld [vmem:[#allocation6 + $0x338] sm:$0xff]
        %v441 = vld [vmem:[#allocation6 + $0x340] sm:$0xff]
        %v442 = vld [vmem:[#allocation6 + $0x348] sm:$0xff]
        %v443 = vld [vmem:[#allocation6 + $0x350] sm:$0xff]
        %v444 = vld [vmem:[#allocation6 + $0x358] sm:$0xff]
        %v445 = vld [vmem:[#allocation6 + $0x360] sm:$0xff]
        %v446 = vld [vmem:[#allocation6 + $0x368] sm:$0xff]
        %v447 = vld [vmem:[#allocation6 + $0x370] sm:$0xff]
        %v448 = vld [vmem:[#allocation6 + $0x378] sm:$0xff]
        %v449 = vld [vmem:[#allocation6 + $0x380] sm:$0xff]
        %v450 = vld [vmem:[#allocation6 + $0x388] sm:$0xff]
        %v451 = vld [vmem:[#allocation6 + $0x390] sm:$0xff]
        %v452 = vld [vmem:[#allocation6 + $0x398] sm:$0xff]
        %v453 = vld [vmem:[#allocation6 + $0x3a0] sm:$0xff]
        %v454 = vld [vmem:[#allocation6 + $0x3a8] sm:$0xff]
        %v455 = vld [vmem:[#allocation6 + $0x3b0] sm:$0xff]
        %v456 = vld [vmem:[#allocation6 + $0x3b8] sm:$0xff]
        %v457 = vld [vmem:[#allocation6 + $0x3c0] sm:$0xff]
        %v458 = vld [vmem:[#allocation6 + $0x3c8] sm:$0xff]
        %v459 = vld [vmem:[#allocation6 + $0x3d0] sm:$0xff]
        %v460 = vld [vmem:[#allocation6 + $0x3d8] sm:$0xff]
        %v461 = vld [vmem:[#allocation6 + $0x3e0] sm:$0xff]
        %v462 = vld [vmem:[#allocation6 + $0x3e8] sm:$0xff]
        %v463 = vld [vmem:[#allocation6 + $0x3f0] sm:$0xff]
        %v464 = vld [vmem:[#allocation6 + $0x3f8] sm:$0xff]
        %v465 = vld [vmem:[#allocation6 + $0x400] sm:$0xff]
        %v466 = vld [vmem:[#allocation6 + $0x408] sm:$0xff]
        %v467 = vld [vmem:[#allocation6 + $0x410] sm:$0xff]
        %v468 = vld [vmem:[#allocation6 + $0x418] sm:$0xff]
        %v469 = vld [vmem:[#allocation6 + $0x420] sm:$0xff]
        %v470 = vld [vmem:[#allocation6 + $0x428] sm:$0xff]
        %v471 = vld [vmem:[#allocation6 + $0x430] sm:$0xff]
        %v472 = vld [vmem:[#allocation6 + $0x438] sm:$0xff]
        %v473 = vld [vmem:[#allocation6 + $0x440] sm:$0xff]
        %v474 = vld [vmem:[#allocation6 + $0x448] sm:$0xff]
        %v475 = vld [vmem:[#allocation6 + $0x450] sm:$0xff]
        %v476 = vld [vmem:[#allocation6 + $0x458] sm:$0xff]
        %v477 = vld [vmem:[#allocation6 + $0x460] sm:$0xff]
        %v478 = vld [vmem:[#allocation6 + $0x468] sm:$0xff]
        %v479 = vld [vmem:[#allocation6 + $0x470] sm:$0xff]
        %v480 = vld [vmem:[#allocation6 + $0x478] sm:$0xff]
        %v481 = vld [vmem:[#allocation6 + $0x480] sm:$0xff]
        %v482 = vld [vmem:[#allocation6 + $0x488] sm:$0xff]
        %v483 = vld [vmem:[#allocation6 + $0x490] sm:$0xff]
        %v484 = vld [vmem:[#allocation6 + $0x498] sm:$0xff]
        %v485 = vld [vmem:[#allocation6 + $0x4a0] sm:$0xff]
        %v486 = vld [vmem:[#allocation6 + $0x4a8] sm:$0xff]
        %v487 = vld [vmem:[#allocation6 + $0x4b0] sm:$0xff]
        %v488 = vld [vmem:[#allocation6 + $0x4b8] sm:$0xff]
        %v489 = vld [vmem:[#allocation6 + $0x4c0] sm:$0xff]
        %v490 = vld [vmem:[#allocation6 + $0x4c8] sm:$0xff]
        %v491 = vld [vmem:[#allocation6 + $0x4d0] sm:$0xff]
        %v492 = vld [vmem:[#allocation6 + $0x4d8] sm:$0xff]
        %v493 = vld [vmem:[#allocation6 + $0x4e0] sm:$0xff]
        %v494 = vld [vmem:[#allocation6 + $0x4e8] sm:$0xff]
        %v495 = vld [vmem:[#allocation6 + $0x4f0] sm:$0xff]
        %v496 = vld [vmem:[#allocation6 + $0x4f8] sm:$0xff]
        %v497 = vld [vmem:[#allocation6 + $0x500] sm:$0xff]
        %v498 = vld [vmem:[#allocation6 + $0x508] sm:$0xff]
        %v499 = vld [vmem:[#allocation6 + $0x510] sm:$0xff]
        %v500 = vld [vmem:[#allocation6 + $0x518] sm:$0xff]
        %v501 = vld [vmem:[#allocation6 + $0x520] sm:$0xff]
        %v502 = vld [vmem:[#allocation6 + $0x528] sm:$0xff]
        %v503 = vld [vmem:[#allocation6 + $0x530] sm:$0xff]
        %v504 = vld [vmem:[#allocation6 + $0x538] sm:$0xff]
        %v505 = vld [vmem:[#allocation6 + $0x540] sm:$0xff]
        %v506 = vld [vmem:[#allocation6 + $0x548] sm:$0xff]
        %v507 = vld [vmem:[#allocation6 + $0x550] sm:$0xff]
        %v508 = vld [vmem:[#allocation6 + $0x558] sm:$0xff]
        %v509 = vld [vmem:[#allocation6 + $0x560] sm:$0xff]
        %v510 = vld [vmem:[#allocation6 + $0x568] sm:$0xff]
        %v511 = vld [vmem:[#allocation6 + $0x570] sm:$0xff]
        %v512 = vld [vmem:[#allocation6 + $0x578] sm:$0xff]
        %v513 = vld [vmem:[#allocation6 + $0x580] sm:$0xff]
        %v514 = vld [vmem:[#allocation6 + $0x588] sm:$0xff]
        %v515 = vld [vmem:[#allocation6 + $0x590] sm:$0xff]
        %v516 = vld [vmem:[#allocation6 + $0x598] sm:$0xff]
        %v517 = vld [vmem:[#allocation6 + $0x5a0] sm:$0xff]
        %v518 = vld [vmem:[#allocation6 + $0x5a8] sm:$0xff]
        %v519 = vld [vmem:[#allocation6 + $0x5b0] sm:$0xff]
        %v520 = vld [vmem:[#allocation6 + $0x5b8] sm:$0xff]
        %v521 = vld [vmem:[#allocation6 + $0x5c0] sm:$0xff]
        %v522 = vld [vmem:[#allocation6 + $0x5c8] sm:$0xff]
        %v523 = vld [vmem:[#allocation6 + $0x5d0] sm:$0xff]
        %v524 = vld [vmem:[#allocation6 + $0x5d8] sm:$0xff]
        %v525 = vld [vmem:[#allocation6 + $0x5e0] sm:$0xff]
        %v526 = vld [vmem:[#allocation6 + $0x5e8] sm:$0xff]
        %v527 = vld [vmem:[#allocation6 + $0x5f0] sm:$0xff]
        %v528 = vld [vmem:[#allocation6 + $0x5f8] sm:$0xff]
        %v529 = vld [vmem:[%s2] sm:$0xf]
        %v531 = vlaneseq
        %v532 = vshrl.u32 %v531, 7
        %v533 = vsub.s32 0, %v532
        %v534 = vrot.slane %v529, %v533
        %v535 = vlaneseq
        %v536 = vshrl.u32 %v535, 7
        %v537 = vsub.s32 1, %v536
        %v538 = vrot.slane %v529, %v537
        %v539 = vlaneseq
        %v540 = vshrl.u32 %v539, 7
        %v541 = vsub.s32 2, %v540
        %v542 = vrot.slane %v529, %v541
        %v543 = vlaneseq
        %v544 = vshrl.u32 %v543, 7
        %v545 = vsub.s32 3, %v544
        %v546 = vrot.slane %v529, %v545
        %v743 = vunpack.c.l.b16 %v337
        %v744 = vunpack.c.h.b16 %v337
        %v745 = vunpack.c.l.b16 %v338
        %v746 = vunpack.c.h.b16 %v338
        %v747 = vunpack.c.l.b16 %v339
        %v748 = vunpack.c.h.b16 %v339
        %v749 = vunpack.c.l.b16 %v340
        %v750 = vunpack.c.h.b16 %v340
        %v751 = vunpack.c.l.b16 %v341
        %v752 = vunpack.c.h.b16 %v341
        %v753 = vunpack.c.l.b16 %v342
        %v754 = vunpack.c.h.b16 %v342
        %v755 = vunpack.c.l.b16 %v343
        %v756 = vunpack.c.h.b16 %v343
        %v757 = vunpack.c.l.b16 %v344
        %v758 = vunpack.c.h.b16 %v344
        %v759 = vunpack.c.l.b16 %v345
        %v760 = vunpack.c.h.b16 %v345
        %v761 = vunpack.c.l.b16 %v346
        %v762 = vunpack.c.h.b16 %v346
        %v763 = vunpack.c.l.b16 %v347
        %v764 = vunpack.c.h.b16 %v347
        %v765 = vunpack.c.l.b16 %v348
        %v766 = vunpack.c.h.b16 %v348
        %v767 = vunpack.c.l.b16 %v349
        %v768 = vunpack.c.h.b16 %v349
        %v769 = vunpack.c.l.b16 %v350
        %v770 = vunpack.c.h.b16 %v350
        %v771 = vunpack.c.l.b16 %v351
        %v772 = vunpack.c.h.b16 %v351
        %v773 = vunpack.c.l.b16 %v352
        %v774 = vunpack.c.h.b16 %v352
        %v775 = vunpack.c.l.b16 %v353
        %v776 = vunpack.c.h.b16 %v353
        %v777 = vunpack.c.l.b16 %v354
        %v778 = vunpack.c.h.b16 %v354
        %v779 = vunpack.c.l.b16 %v355
        %v780 = vunpack.c.h.b16 %v355
        %v781 = vunpack.c.l.b16 %v356
        %v782 = vunpack.c.h.b16 %v356
        %v783 = vunpack.c.l.b16 %v357
        %v784 = vunpack.c.h.b16 %v357
        %v785 = vunpack.c.l.b16 %v358
        %v786 = vunpack.c.h.b16 %v358
        %v787 = vunpack.c.l.b16 %v359
        %v788 = vunpack.c.h.b16 %v359
        %v789 = vunpack.c.l.b16 %v360
        %v790 = vunpack.c.h.b16 %v360
        %v791 = vunpack.c.l.b16 %v361
        %v792 = vunpack.c.h.b16 %v361
        %v793 = vunpack.c.l.b16 %v362
        %v794 = vunpack.c.h.b16 %v362
        %v795 = vunpack.c.l.b16 %v363
        %v796 = vunpack.c.h.b16 %v363
        %v797 = vunpack.c.l.b16 %v364
        %v798 = vunpack.c.h.b16 %v364
        %v799 = vunpack.c.l.b16 %v365
        %v800 = vunpack.c.h.b16 %v365
        %v801 = vunpack.c.l.b16 %v366
        %v802 = vunpack.c.h.b16 %v366
        %v803 = vunpack.c.l.b16 %v367
        %v804 = vunpack.c.h.b16 %v367
        %v805 = vunpack.c.l.b16 %v368
        %v806 = vunpack.c.h.b16 %v368
        %v807 = vunpack.c.l.b16 %v369
        %v808 = vunpack.c.h.b16 %v369
        %v809 = vunpack.c.l.b16 %v370
        %v810 = vunpack.c.h.b16 %v370
        %v811 = vunpack.c.l.b16 %v371
        %v812 = vunpack.c.h.b16 %v371
        %v813 = vunpack.c.l.b16 %v372
        %v814 = vunpack.c.h.b16 %v372
        %v815 = vunpack.c.l.b16 %v373
        %v816 = vunpack.c.h.b16 %v373
        %v817 = vunpack.c.l.b16 %v374
        %v818 = vunpack.c.h.b16 %v374
        %v819 = vunpack.c.l.b16 %v375
        %v820 = vunpack.c.h.b16 %v375
        %v821 = vunpack.c.l.b16 %v376
        %v822 = vunpack.c.h.b16 %v376
        %v823 = vunpack.c.l.b16 %v377
        %v824 = vunpack.c.h.b16 %v377
        %v825 = vunpack.c.l.b16 %v378
        %v826 = vunpack.c.h.b16 %v378
        %v827 = vunpack.c.l.b16 %v379
        %v828 = vunpack.c.h.b16 %v379
        %v829 = vunpack.c.l.b16 %v380
        %v830 = vunpack.c.h.b16 %v380
        %v831 = vunpack.c.l.b16 %v381
        %v832 = vunpack.c.h.b16 %v381
        %v833 = vunpack.c.l.b16 %v382
        %v834 = vunpack.c.h.b16 %v382
        %v835 = vunpack.c.l.b16 %v383
        %v836 = vunpack.c.h.b16 %v383
        %v837 = vunpack.c.l.b16 %v384
        %v838 = vunpack.c.h.b16 %v384
        %v839 = vunpack.c.l.b16 %v385
        %v840 = vunpack.c.h.b16 %v385
        %v841 = vunpack.c.l.b16 %v386
        %v842 = vunpack.c.h.b16 %v386
        %v843 = vunpack.c.l.b16 %v387
        %v844 = vunpack.c.h.b16 %v387
        %v845 = vunpack.c.l.b16 %v388
        %v846 = vunpack.c.h.b16 %v388
        %v847 = vunpack.c.l.b16 %v389
        %v848 = vunpack.c.h.b16 %v389
        %v849 = vunpack.c.l.b16 %v390
        %v850 = vunpack.c.h.b16 %v390
        %v851 = vunpack.c.l.b16 %v391
        %v852 = vunpack.c.h.b16 %v391
        %v853 = vunpack.c.l.b16 %v392
        %v854 = vunpack.c.h.b16 %v392
        %v855 = vunpack.c.l.b16 %v393
        %v856 = vunpack.c.h.b16 %v393
        %v857 = vunpack.c.l.b16 %v394
        %v858 = vunpack.c.h.b16 %v394
        %v859 = vunpack.c.l.b16 %v395
        %v860 = vunpack.c.h.b16 %v395
        %v861 = vunpack.c.l.b16 %v396
        %v862 = vunpack.c.h.b16 %v396
        %v863 = vunpack.c.l.b16 %v397
        %v864 = vunpack.c.h.b16 %v397
        %v865 = vunpack.c.l.b16 %v398
        %v866 = vunpack.c.h.b16 %v398
        %v867 = vunpack.c.l.b16 %v399
        %v868 = vunpack.c.h.b16 %v399
        %v869 = vunpack.c.l.b16 %v400
        %v870 = vunpack.c.h.b16 %v400
        %v871 = vunpack.c.l.b16 %v401
        %v872 = vunpack.c.h.b16 %v401
        %v873 = vunpack.c.l.b16 %v402
        %v874 = vunpack.c.h.b16 %v402
        %v875 = vunpack.c.l.b16 %v403
        %v876 = vunpack.c.h.b16 %v403
        %v877 = vunpack.c.l.b16 %v404
        %v878 = vunpack.c.h.b16 %v404
        %v879 = vunpack.c.l.b16 %v405
        %v880 = vunpack.c.h.b16 %v405
        %v881 = vunpack.c.l.b16 %v406
        %v882 = vunpack.c.h.b16 %v406
        %v883 = vunpack.c.l.b16 %v407
        %v884 = vunpack.c.h.b16 %v407
        %v885 = vunpack.c.l.b16 %v408
        %v886 = vunpack.c.h.b16 %v408
        %v887 = vunpack.c.l.b16 %v409
        %v888 = vunpack.c.h.b16 %v409
        %v889 = vunpack.c.l.b16 %v410
        %v890 = vunpack.c.h.b16 %v410
        %v891 = vunpack.c.l.b16 %v411
        %v892 = vunpack.c.h.b16 %v411
        %v893 = vunpack.c.l.b16 %v412
        %v894 = vunpack.c.h.b16 %v412
        %v895 = vunpack.c.l.b16 %v413
        %v896 = vunpack.c.h.b16 %v413
        %v897 = vunpack.c.l.b16 %v414
        %v898 = vunpack.c.h.b16 %v414
        %v899 = vunpack.c.l.b16 %v415
        %v900 = vunpack.c.h.b16 %v415
        %v901 = vunpack.c.l.b16 %v416
        %v902 = vunpack.c.h.b16 %v416
        %v903 = vunpack.c.l.b16 %v417
        %v904 = vunpack.c.h.b16 %v417
        %v905 = vunpack.c.l.b16 %v418
        %v906 = vunpack.c.h.b16 %v418
        %v907 = vunpack.c.l.b16 %v419
        %v908 = vunpack.c.h.b16 %v419
        %v909 = vunpack.c.l.b16 %v420
        %v910 = vunpack.c.h.b16 %v420
        %v911 = vunpack.c.l.b16 %v421
        %v912 = vunpack.c.h.b16 %v421
        %v913 = vunpack.c.l.b16 %v422
        %v914 = vunpack.c.h.b16 %v422
        %v915 = vunpack.c.l.b16 %v423
        %v916 = vunpack.c.h.b16 %v423
        %v917 = vunpack.c.l.b16 %v424
        %v918 = vunpack.c.h.b16 %v424
        %v919 = vunpack.c.l.b16 %v425
        %v920 = vunpack.c.h.b16 %v425
        %v921 = vunpack.c.l.b16 %v426
        %v922 = vunpack.c.h.b16 %v426
        %v923 = vunpack.c.l.b16 %v427
        %v924 = vunpack.c.h.b16 %v427
        %v925 = vunpack.c.l.b16 %v428
        %v926 = vunpack.c.h.b16 %v428
        %v927 = vunpack.c.l.b16 %v429
        %v928 = vunpack.c.h.b16 %v429
        %v929 = vunpack.c.l.b16 %v430
        %v930 = vunpack.c.h.b16 %v430
        %v931 = vunpack.c.l.b16 %v431
        %v932 = vunpack.c.h.b16 %v431
        %v933 = vunpack.c.l.b16 %v432
        %v934 = vunpack.c.h.b16 %v432
        %v935 = vunpack.c.l.b16 %v433
        %v936 = vunpack.c.h.b16 %v433
        %v937 = vunpack.c.l.b16 %v434
        %v938 = vunpack.c.h.b16 %v434
        %v939 = vunpack.c.l.b16 %v435
        %v940 = vunpack.c.h.b16 %v435
        %v941 = vunpack.c.l.b16 %v436
        %v942 = vunpack.c.h.b16 %v436
        %v943 = vunpack.c.l.b16 %v437
        %v944 = vunpack.c.h.b16 %v437
        %v945 = vunpack.c.l.b16 %v438
        %v946 = vunpack.c.h.b16 %v438
        %v947 = vunpack.c.l.b16 %v439
        %v948 = vunpack.c.h.b16 %v439
        %v949 = vunpack.c.l.b16 %v440
        %v950 = vunpack.c.h.b16 %v440
        %v951 = vunpack.c.l.b16 %v441
        %v952 = vunpack.c.h.b16 %v441
        %v953 = vunpack.c.l.b16 %v442
        %v954 = vunpack.c.h.b16 %v442
        %v955 = vunpack.c.l.b16 %v443
        %v956 = vunpack.c.h.b16 %v443
        %v957 = vunpack.c.l.b16 %v444
        %v958 = vunpack.c.h.b16 %v444
        %v959 = vunpack.c.l.b16 %v445
        %v960 = vunpack.c.h.b16 %v445
        %v961 = vunpack.c.l.b16 %v446
        %v962 = vunpack.c.h.b16 %v446
        %v963 = vunpack.c.l.b16 %v447
        %v964 = vunpack.c.h.b16 %v447
        %v965 = vunpack.c.l.b16 %v448
        %v966 = vunpack.c.h.b16 %v448
        %v967 = vunpack.c.l.b16 %v449
        %v968 = vunpack.c.h.b16 %v449
        %v969 = vunpack.c.l.b16 %v450
        %v970 = vunpack.c.h.b16 %v450
        %v971 = vunpack.c.l.b16 %v451
        %v972 = vunpack.c.h.b16 %v451
        %v973 = vunpack.c.l.b16 %v452
        %v974 = vunpack.c.h.b16 %v452
        %v975 = vunpack.c.l.b16 %v453
        %v976 = vunpack.c.h.b16 %v453
        %v977 = vunpack.c.l.b16 %v454
        %v978 = vunpack.c.h.b16 %v454
        %v979 = vunpack.c.l.b16 %v455
        %v980 = vunpack.c.h.b16 %v455
        %v981 = vunpack.c.l.b16 %v456
        %v982 = vunpack.c.h.b16 %v456
        %v983 = vunpack.c.l.b16 %v457
        %v984 = vunpack.c.h.b16 %v457
        %v985 = vunpack.c.l.b16 %v458
        %v986 = vunpack.c.h.b16 %v458
        %v987 = vunpack.c.l.b16 %v459
        %v988 = vunpack.c.h.b16 %v459
        %v989 = vunpack.c.l.b16 %v460
        %v990 = vunpack.c.h.b16 %v460
        %v991 = vunpack.c.l.b16 %v461
        %v992 = vunpack.c.h.b16 %v461
        %v993 = vunpack.c.l.b16 %v462
        %v994 = vunpack.c.h.b16 %v462
        %v995 = vunpack.c.l.b16 %v463
        %v996 = vunpack.c.h.b16 %v463
        %v997 = vunpack.c.l.b16 %v464
        %v998 = vunpack.c.h.b16 %v464
        %v999 = vunpack.c.l.b16 %v465
        %v1000 = vunpack.c.h.b16 %v465
        %v1001 = vunpack.c.l.b16 %v466
        %v1002 = vunpack.c.h.b16 %v466
        %v1003 = vunpack.c.l.b16 %v467
        %v1004 = vunpack.c.h.b16 %v467
        %v1005 = vunpack.c.l.b16 %v468
        %v1006 = vunpack.c.h.b16 %v468
        %v1007 = vunpack.c.l.b16 %v469
        %v1008 = vunpack.c.h.b16 %v469
        %v1009 = vunpack.c.l.b16 %v470
        %v1010 = vunpack.c.h.b16 %v470
        %v1011 = vunpack.c.l.b16 %v471
        %v1012 = vunpack.c.h.b16 %v471
        %v1013 = vunpack.c.l.b16 %v472
        %v1014 = vunpack.c.h.b16 %v472
        %v1015 = vunpack.c.l.b16 %v473
        %v1016 = vunpack.c.h.b16 %v473
        %v1017 = vunpack.c.l.b16 %v474
        %v1018 = vunpack.c.h.b16 %v474
        %v1019 = vunpack.c.l.b16 %v475
        %v1020 = vunpack.c.h.b16 %v475
        %v1021 = vunpack.c.l.b16 %v476
        %v1022 = vunpack.c.h.b16 %v476
        %v1023 = vunpack.c.l.b16 %v477
        %v1024 = vunpack.c.h.b16 %v477
        %v1025 = vunpack.c.l.b16 %v478
        %v1026 = vunpack.c.h.b16 %v478
        %v1027 = vunpack.c.l.b16 %v479
        %v1028 = vunpack.c.h.b16 %v479
        %v1029 = vunpack.c.l.b16 %v480
        %v1030 = vunpack.c.h.b16 %v480
        %v1031 = vunpack.c.l.b16 %v481
        %v1032 = vunpack.c.h.b16 %v481
        %v1033 = vunpack.c.l.b16 %v482
        %v1034 = vunpack.c.h.b16 %v482
        %v1035 = vunpack.c.l.b16 %v483
        %v1036 = vunpack.c.h.b16 %v483
        %v1037 = vunpack.c.l.b16 %v484
        %v1038 = vunpack.c.h.b16 %v484
        %v1039 = vunpack.c.l.b16 %v485
        %v1040 = vunpack.c.h.b16 %v485
        %v1041 = vunpack.c.l.b16 %v486
        %v1042 = vunpack.c.h.b16 %v486
        %v1043 = vunpack.c.l.b16 %v487
        %v1044 = vunpack.c.h.b16 %v487
        %v1045 = vunpack.c.l.b16 %v488
        %v1046 = vunpack.c.h.b16 %v488
        %v1047 = vunpack.c.l.b16 %v489
        %v1048 = vunpack.c.h.b16 %v489
        %v1049 = vunpack.c.l.b16 %v490
        %v1050 = vunpack.c.h.b16 %v490
        %v1051 = vunpack.c.l.b16 %v491
        %v1052 = vunpack.c.h.b16 %v491
        %v1053 = vunpack.c.l.b16 %v492
        %v1054 = vunpack.c.h.b16 %v492
        %v1055 = vunpack.c.l.b16 %v493
        %v1056 = vunpack.c.h.b16 %v493
        %v1057 = vunpack.c.l.b16 %v494
        %v1058 = vunpack.c.h.b16 %v494
        %v1059 = vunpack.c.l.b16 %v495
        %v1060 = vunpack.c.h.b16 %v495
        %v1061 = vunpack.c.l.b16 %v496
        %v1062 = vunpack.c.h.b16 %v496
        %v1063 = vunpack.c.l.b16 %v497
        %v1064 = vunpack.c.h.b16 %v497
        %v1065 = vunpack.c.l.b16 %v498
        %v1066 = vunpack.c.h.b16 %v498
        %v1067 = vunpack.c.l.b16 %v499
        %v1068 = vunpack.c.h.b16 %v499
        %v1069 = vunpack.c.l.b16 %v500
        %v1070 = vunpack.c.h.b16 %v500
        %v1071 = vunpack.c.l.b16 %v501
        %v1072 = vunpack.c.h.b16 %v501
        %v1073 = vunpack.c.l.b16 %v502
        %v1074 = vunpack.c.h.b16 %v502
        %v1075 = vunpack.c.l.b16 %v503
        %v1076 = vunpack.c.h.b16 %v503
        %v1077 = vunpack.c.l.b16 %v504
        %v1078 = vunpack.c.h.b16 %v504
        %v1079 = vunpack.c.l.b16 %v505
        %v1080 = vunpack.c.h.b16 %v505
        %v1081 = vunpack.c.l.b16 %v506
        %v1082 = vunpack.c.h.b16 %v506
        %v1083 = vunpack.c.l.b16 %v507
        %v1084 = vunpack.c.h.b16 %v507
        %v1085 = vunpack.c.l.b16 %v508
        %v1086 = vunpack.c.h.b16 %v508
        %v1087 = vunpack.c.l.b16 %v509
        %v1088 = vunpack.c.h.b16 %v509
        %v1089 = vunpack.c.l.b16 %v510
        %v1090 = vunpack.c.h.b16 %v510
        %v1091 = vunpack.c.l.b16 %v511
        %v1092 = vunpack.c.h.b16 %v511
        %v1093 = vunpack.c.l.b16 %v512
        %v1094 = vunpack.c.h.b16 %v512
        %v1095 = vunpack.c.l.b16 %v513
        %v1096 = vunpack.c.h.b16 %v513
        %v1097 = vunpack.c.l.b16 %v514
        %v1098 = vunpack.c.h.b16 %v514
        %v1099 = vunpack.c.l.b16 %v515
        %v1100 = vunpack.c.h.b16 %v515
        %v1101 = vunpack.c.l.b16 %v516
        %v1102 = vunpack.c.h.b16 %v516
        %v1103 = vunpack.c.l.b16 %v517
        %v1104 = vunpack.c.h.b16 %v517
        %v1105 = vunpack.c.l.b16 %v518
        %v1106 = vunpack.c.h.b16 %v518
        %v1107 = vunpack.c.l.b16 %v519
        %v1108 = vunpack.c.h.b16 %v519
        %v1109 = vunpack.c.l.b16 %v520
        %v1110 = vunpack.c.h.b16 %v520
        %v1111 = vunpack.c.l.b16 %v521
        %v1112 = vunpack.c.h.b16 %v521
        %v1113 = vunpack.c.l.b16 %v522
        %v1114 = vunpack.c.h.b16 %v522
        %v1115 = vunpack.c.l.b16 %v523
        %v1116 = vunpack.c.h.b16 %v523
        %v1117 = vunpack.c.l.b16 %v524
        %v1118 = vunpack.c.h.b16 %v524
        %v1119 = vunpack.c.l.b16 %v525
        %v1120 = vunpack.c.h.b16 %v525
        %v1121 = vunpack.c.l.b16 %v526
        %v1122 = vunpack.c.h.b16 %v526
        %v1123 = vunpack.c.l.b16 %v527
        %v1124 = vunpack.c.h.b16 %v527
        %v1125 = vunpack.c.l.b16 %v528
        %v1126 = vunpack.c.h.b16 %v528
        %v1127 = vpack.c.b16 %v747, %v743
        %v1128 = vpack.c.b16 %v748, %v744
        %v1129 = vpack.c.b16 %v749, %v745
        %v1130 = vpack.c.b16 %v750, %v746
        %v1131 = vpack.c.b16 %v755, %v751
        %v1132 = vpack.c.b16 %v756, %v752
        %v1133 = vpack.c.b16 %v757, %v753
        %v1134 = vpack.c.b16 %v758, %v754
        %v1135 = vpack.c.b16 %v763, %v759
        %v1136 = vpack.c.b16 %v764, %v760
        %v1137 = vpack.c.b16 %v765, %v761
        %v1138 = vpack.c.b16 %v766, %v762
        %v1139 = vpack.c.b16 %v771, %v767
        %v1140 = vpack.c.b16 %v772, %v768
        %v1141 = vpack.c.b16 %v773, %v769
        %v1142 = vpack.c.b16 %v774, %v770
        %v1143 = vpack.c.b16 %v779, %v775
        %v1144 = vpack.c.b16 %v780, %v776
        %v1145 = vpack.c.b16 %v781, %v777
        %v1146 = vpack.c.b16 %v782, %v778
        %v1147 = vpack.c.b16 %v787, %v783
        %v1148 = vpack.c.b16 %v788, %v784
        %v1149 = vpack.c.b16 %v789, %v785
        %v1150 = vpack.c.b16 %v790, %v786
        %v1151 = vpack.c.b16 %v795, %v791
        %v1152 = vpack.c.b16 %v796, %v792
        %v1153 = vpack.c.b16 %v797, %v793
        %v1154 = vpack.c.b16 %v798, %v794
        %v1155 = vpack.c.b16 %v803, %v799
        %v1156 = vpack.c.b16 %v804, %v800
        %v1157 = vpack.c.b16 %v805, %v801
        %v1158 = vpack.c.b16 %v806, %v802
        %v1159 = vpack.c.b16 %v811, %v807
        %v1160 = vpack.c.b16 %v812, %v808
        %v1161 = vpack.c.b16 %v813, %v809
        %v1162 = vpack.c.b16 %v814, %v810
        %v1163 = vpack.c.b16 %v819, %v815
        %v1164 = vpack.c.b16 %v820, %v816
        %v1165 = vpack.c.b16 %v821, %v817
        %v1166 = vpack.c.b16 %v822, %v818
        %v1167 = vpack.c.b16 %v827, %v823
        %v1168 = vpack.c.b16 %v828, %v824
        %v1169 = vpack.c.b16 %v829, %v825
        %v1170 = vpack.c.b16 %v830, %v826
        %v1171 = vpack.c.b16 %v835, %v831
        %v1172 = vpack.c.b16 %v836, %v832
        %v1173 = vpack.c.b16 %v837, %v833
        %v1174 = vpack.c.b16 %v838, %v834
        %v1175 = vpack.c.b16 %v843, %v839
        %v1176 = vpack.c.b16 %v844, %v840
        %v1177 = vpack.c.b16 %v845, %v841
        %v1178 = vpack.c.b16 %v846, %v842
        %v1179 = vpack.c.b16 %v851, %v847
        %v1180 = vpack.c.b16 %v852, %v848
        %v1181 = vpack.c.b16 %v853, %v849
        %v1182 = vpack.c.b16 %v854, %v850
        %v1183 = vpack.c.b16 %v859, %v855
        %v1184 = vpack.c.b16 %v860, %v856
        %v1185 = vpack.c.b16 %v861, %v857
        %v1186 = vpack.c.b16 %v862, %v858
        %v1187 = vpack.c.b16 %v867, %v863
        %v1188 = vpack.c.b16 %v868, %v864
        %v1189 = vpack.c.b16 %v869, %v865
        %v1190 = vpack.c.b16 %v870, %v866
        %v1191 = vpack.c.b16 %v875, %v871
        %v1192 = vpack.c.b16 %v876, %v872
        %v1193 = vpack.c.b16 %v877, %v873
        %v1194 = vpack.c.b16 %v878, %v874
        %v1195 = vpack.c.b16 %v883, %v879
        %v1196 = vpack.c.b16 %v884, %v880
        %v1197 = vpack.c.b16 %v885, %v881
        %v1198 = vpack.c.b16 %v886, %v882
        %v1199 = vpack.c.b16 %v891, %v887
        %v1200 = vpack.c.b16 %v892, %v888
        %v1201 = vpack.c.b16 %v893, %v889
        %v1202 = vpack.c.b16 %v894, %v890
        %v1203 = vpack.c.b16 %v899, %v895
        %v1204 = vpack.c.b16 %v900, %v896
        %v1205 = vpack.c.b16 %v901, %v897
        %v1206 = vpack.c.b16 %v902, %v898
        %v1207 = vpack.c.b16 %v907, %v903
        %v1208 = vpack.c.b16 %v908, %v904
        %v1209 = vpack.c.b16 %v909, %v905
        %v1210 = vpack.c.b16 %v910, %v906
        %v1211 = vpack.c.b16 %v915, %v911
        %v1212 = vpack.c.b16 %v916, %v912
        %v1213 = vpack.c.b16 %v917, %v913
        %v1214 = vpack.c.b16 %v918, %v914
        %v1215 = vpack.c.b16 %v923, %v919
        %v1216 = vpack.c.b16 %v924, %v920
        %v1217 = vpack.c.b16 %v925, %v921
        %v1218 = vpack.c.b16 %v926, %v922
        %v1219 = vpack.c.b16 %v931, %v927
        %v1220 = vpack.c.b16 %v932, %v928
        %v1221 = vpack.c.b16 %v933, %v929
        %v1222 = vpack.c.b16 %v934, %v930
        %v1223 = vpack.c.b16 %v939, %v935
        %v1224 = vpack.c.b16 %v940, %v936
        %v1225 = vpack.c.b16 %v941, %v937
        %v1226 = vpack.c.b16 %v942, %v938
        %v1227 = vpack.c.b16 %v947, %v943
        %v1228 = vpack.c.b16 %v948, %v944
        %v1229 = vpack.c.b16 %v949, %v945
        %v1230 = vpack.c.b16 %v950, %v946
        %v1231 = vpack.c.b16 %v955, %v951
        %v1232 = vpack.c.b16 %v956, %v952
        %v1233 = vpack.c.b16 %v957, %v953
        %v1234 = vpack.c.b16 %v958, %v954
        %v1235 = vpack.c.b16 %v963, %v959
        %v1236 = vpack.c.b16 %v964, %v960
        %v1237 = vpack.c.b16 %v965, %v961
        %v1238 = vpack.c.b16 %v966, %v962
        %v1239 = vpack.c.b16 %v971, %v967
        %v1240 = vpack.c.b16 %v972, %v968
        %v1241 = vpack.c.b16 %v973, %v969
        %v1242 = vpack.c.b16 %v974, %v970
        %v1243 = vpack.c.b16 %v979, %v975
        %v1244 = vpack.c.b16 %v980, %v976
        %v1245 = vpack.c.b16 %v981, %v977
        %v1246 = vpack.c.b16 %v982, %v978
        %v1247 = vpack.c.b16 %v987, %v983
        %v1248 = vpack.c.b16 %v988, %v984
        %v1249 = vpack.c.b16 %v989, %v985
        %v1250 = vpack.c.b16 %v990, %v986
        %v1251 = vpack.c.b16 %v995, %v991
        %v1252 = vpack.c.b16 %v996, %v992
        %v1253 = vpack.c.b16 %v997, %v993
        %v1254 = vpack.c.b16 %v998, %v994
        %v1255 = vpack.c.b16 %v1003, %v999
        %v1256 = vpack.c.b16 %v1004, %v1000
        %v1257 = vpack.c.b16 %v1005, %v1001
        %v1258 = vpack.c.b16 %v1006, %v1002
        %v1259 = vpack.c.b16 %v1011, %v1007
        %v1260 = vpack.c.b16 %v1012, %v1008
        %v1261 = vpack.c.b16 %v1013, %v1009
        %v1262 = vpack.c.b16 %v1014, %v1010
        %v1263 = vpack.c.b16 %v1019, %v1015
        %v1264 = vpack.c.b16 %v1020, %v1016
        %v1265 = vpack.c.b16 %v1021, %v1017
        %v1266 = vpack.c.b16 %v1022, %v1018
        %v1267 = vpack.c.b16 %v1027, %v1023
        %v1268 = vpack.c.b16 %v1028, %v1024
        %v1269 = vpack.c.b16 %v1029, %v1025
        %v1270 = vpack.c.b16 %v1030, %v1026
        %v1271 = vpack.c.b16 %v1035, %v1031
        %v1272 = vpack.c.b16 %v1036, %v1032
        %v1273 = vpack.c.b16 %v1037, %v1033
        %v1274 = vpack.c.b16 %v1038, %v1034
        %v1275 = vpack.c.b16 %v1043, %v1039
        %v1276 = vpack.c.b16 %v1044, %v1040
        %v1277 = vpack.c.b16 %v1045, %v1041
        %v1278 = vpack.c.b16 %v1046, %v1042
        %v1279 = vpack.c.b16 %v1051, %v1047
        %v1280 = vpack.c.b16 %v1052, %v1048
        %v1281 = vpack.c.b16 %v1053, %v1049
        %v1282 = vpack.c.b16 %v1054, %v1050
        %v1283 = vpack.c.b16 %v1059, %v1055
        %v1284 = vpack.c.b16 %v1060, %v1056
        %v1285 = vpack.c.b16 %v1061, %v1057
        %v1286 = vpack.c.b16 %v1062, %v1058
        %v1287 = vpack.c.b16 %v1067, %v1063
        %v1288 = vpack.c.b16 %v1068, %v1064
        %v1289 = vpack.c.b16 %v1069, %v1065
        %v1290 = vpack.c.b16 %v1070, %v1066
        %v1291 = vpack.c.b16 %v1075, %v1071
        %v1292 = vpack.c.b16 %v1076, %v1072
        %v1293 = vpack.c.b16 %v1077, %v1073
        %v1294 = vpack.c.b16 %v1078, %v1074
        %v1295 = vpack.c.b16 %v1083, %v1079
        %v1296 = vpack.c.b16 %v1084, %v1080
        %v1297 = vpack.c.b16 %v1085, %v1081
        %v1298 = vpack.c.b16 %v1086, %v1082
        %v1299 = vpack.c.b16 %v1091, %v1087
        %v1300 = vpack.c.b16 %v1092, %v1088
        %v1301 = vpack.c.b16 %v1093, %v1089
        %v1302 = vpack.c.b16 %v1094, %v1090
        %v1303 = vpack.c.b16 %v1099, %v1095
        %v1304 = vpack.c.b16 %v1100, %v1096
        %v1305 = vpack.c.b16 %v1101, %v1097
        %v1306 = vpack.c.b16 %v1102, %v1098
        %v1307 = vpack.c.b16 %v1107, %v1103
        %v1308 = vpack.c.b16 %v1108, %v1104
        %v1309 = vpack.c.b16 %v1109, %v1105
        %v1310 = vpack.c.b16 %v1110, %v1106
        %v1311 = vpack.c.b16 %v1115, %v1111
        %v1312 = vpack.c.b16 %v1116, %v1112
        %v1313 = vpack.c.b16 %v1117, %v1113
        %v1314 = vpack.c.b16 %v1118, %v1114
        %v1315 = vpack.c.b16 %v1123, %v1119
        %v1316 = vpack.c.b16 %v1124, %v1120
        %v1317 = vpack.c.b16 %v1125, %v1121
        %v1318 = vpack.c.b16 %v1126, %v1122
        %1511 = vmatprep.subr.bf16.mxu0 %v1128
        %1512 = vmatpush1.bf16.msra.mxu0 %v1127
        %1513 = vmatprep.subr.bf16.mxu0 %v1132
        %1514 = vmatpush1.bf16.msra.mxu0 %v1131
        %1515 = vmatprep.subr.bf16.mxu0 %v1136
        %1516 = vmatpush1.bf16.msra.mxu0 %v1135
        %1517 = vmatprep.subr.bf16.mxu0 %v1140
        %1518 = vmatpush1.bf16.msra.mxu0 %v1139
        %1519 = vmatprep.subr.bf16.mxu0 %v1144
        %1520 = vmatpush1.bf16.msra.mxu0 %v1143
        %1521 = vmatprep.subr.bf16.mxu0 %v1148
        %1522 = vmatpush1.bf16.msra.mxu0 %v1147
        %1523 = vmatprep.subr.bf16.mxu0 %v1152
        %1524 = vmatpush1.bf16.msra.mxu0 %v1151
        %1525 = vmatprep.subr.bf16.mxu0 %v1156
        %1526 = vmatpush1.bf16.msra.mxu0 %v1155
        %1527 = vmatprep.subr.bf16.mxu0 %v1160
        %1528 = vmatpush1.bf16.msra.mxu0 %v1159
        %1529 = vmatprep.subr.bf16.mxu0 %v1164
        %1530 = vmatpush1.bf16.msra.mxu0 %v1163
        %1531 = vmatprep.subr.bf16.mxu0 %v1168
        %1532 = vmatpush1.bf16.msra.mxu0 %v1167
        %1533 = vmatprep.subr.bf16.mxu0 %v1172
        %1534 = vmatpush1.bf16.msra.mxu0 %v1171
        %1535 = vmatprep.subr.bf16.mxu0 %v1176
        %1536 = vmatpush1.bf16.msra.mxu0 %v1175
        %1537 = vmatprep.subr.bf16.mxu0 %v1180
        %1538 = vmatpush1.bf16.msra.mxu0 %v1179
        %1539 = vmatprep.subr.bf16.mxu0 %v1184
        %1540 = vmatpush1.bf16.msra.mxu0 %v1183
        %1541 = vmatprep.subr.bf16.mxu0 %v1188
        %1542 = vmatpush1.bf16.msra.mxu0 %v1187
        %1543 = vmatprep.mubr.bf16.mxu0 %v332
        %1544 = vmatmul.mubr.bf16.gmra.mrb[0].mxu0 %v331
        %v1545 = vpop.f32.mrb[0].mxu0
        %v1546 = vadd.f32 %v534, %v1545
        %v1547 = vpop.f32.mrb[0].mxu0
        %v1548 = vadd.f32 %v538, %v1547
        %v1549 = vpop.f32.mrb[0].mxu0
        %v1550 = vadd.f32 %v534, %v1549
        %v1551 = vpop.f32.mrb[0].mxu0
        %v1552 = vadd.f32 %v538, %v1551
        %1553 = vdwg.mxu0
        %1554 = vmatprep.subr.bf16.mxu0 %v1192
        %1555 = vmatpush1.bf16.msra.mxu0 %v1191
        %1556 = vmatprep.subr.bf16.mxu0 %v1196
        %1557 = vmatpush1.bf16.msra.mxu0 %v1195
        %1558 = vmatprep.subr.bf16.mxu0 %v1200
        %1559 = vmatpush1.bf16.msra.mxu0 %v1199
        %1560 = vmatprep.subr.bf16.mxu0 %v1204
        %1561 = vmatpush1.bf16.msra.mxu0 %v1203
        %1562 = vmatprep.subr.bf16.mxu0 %v1208
        %1563 = vmatpush1.bf16.msra.mxu0 %v1207
        %1564 = vmatprep.subr.bf16.mxu0 %v1212
        %1565 = vmatpush1.bf16.msra.mxu0 %v1211
        %1566 = vmatprep.subr.bf16.mxu0 %v1216
        %1567 = vmatpush1.bf16.msra.mxu0 %v1215
        %1568 = vmatprep.subr.bf16.mxu0 %v1220
        %1569 = vmatpush1.bf16.msra.mxu0 %v1219
        %1570 = vmatprep.subr.bf16.mxu0 %v1224
        %1571 = vmatpush1.bf16.msra.mxu0 %v1223
        %1572 = vmatprep.subr.bf16.mxu0 %v1228
        %1573 = vmatpush1.bf16.msra.mxu0 %v1227
        %1574 = vmatprep.subr.bf16.mxu0 %v1232
        %1575 = vmatpush1.bf16.msra.mxu0 %v1231
        %1576 = vmatprep.subr.bf16.mxu0 %v1236
        %1577 = vmatpush1.bf16.msra.mxu0 %v1235
        %1578 = vmatprep.subr.bf16.mxu0 %v1240
        %1579 = vmatpush1.bf16.msra.mxu0 %v1239
        %1580 = vmatprep.subr.bf16.mxu0 %v1244
        %1581 = vmatpush1.bf16.msra.mxu0 %v1243
        %1582 = vmatprep.subr.bf16.mxu0 %v1248
        %1583 = vmatpush1.bf16.msra.mxu0 %v1247
        %1584 = vmatprep.subr.bf16.mxu0 %v1252
        %1585 = vmatpush1.bf16.msra.mxu0 %v1251
        %1586 = vmatprep.mubr.bf16.mxu0 %v334
        %1587 = vmatmul.mubr.bf16.gmra.mrb[0].mxu0 %v333
        %v1588 = vpop.f32.mrb[0].mxu0
        %v1589 = vadd.f32 %v1546, %v1588
        %v1590 = vpop.f32.mrb[0].mxu0
        %v1591 = vadd.f32 %v1548, %v1590
        %v1592 = vpop.f32.mrb[0].mxu0
        %v1593 = vadd.f32 %v1550, %v1592
        %v1594 = vpop.f32.mrb[0].mxu0
        %v1595 = vadd.f32 %v1552, %v1594
        %1596 = vdwg.mxu0
        %1597 = vmatprep.subr.bf16.mxu0 %v1256
        %1598 = vmatpush1.bf16.msra.mxu0 %v1255
        %1599 = vmatprep.subr.bf16.mxu0 %v1260
        %1600 = vmatpush1.bf16.msra.mxu0 %v1259
        %1601 = vmatprep.subr.bf16.mxu0 %v1264
        %1602 = vmatpush1.bf16.msra.mxu0 %v1263
        %1603 = vmatprep.subr.bf16.mxu0 %v1268
        %1604 = vmatpush1.bf16.msra.mxu0 %v1267
        %1605 = vmatprep.subr.bf16.mxu0 %v1272
        %1606 = vmatpush1.bf16.msra.mxu0 %v1271
        %1607 = vmatprep.subr.bf16.mxu0 %v1276
        %1608 = vmatpush1.bf16.msra.mxu0 %v1275
        %1609 = vmatprep.subr.bf16.mxu0 %v1280
        %1610 = vmatpush1.bf16.msra.mxu0 %v1279
        %1611 = vmatprep.subr.bf16.mxu0 %v1284
        %1612 = vmatpush1.bf16.msra.mxu0 %v1283
        %1613 = vmatprep.subr.bf16.mxu0 %v1288
        %1614 = vmatpush1.bf16.msra.mxu0 %v1287
        %1615 = vmatprep.subr.bf16.mxu0 %v1292
        %1616 = vmatpush1.bf16.msra.mxu0 %v1291
        %1617 = vmatprep.subr.bf16.mxu0 %v1296
        %1618 = vmatpush1.bf16.msra.mxu0 %v1295
        %1619 = vmatprep.subr.bf16.mxu0 %v1300
        %1620 = vmatpush1.bf16.msra.mxu0 %v1299
        %1621 = vmatprep.subr.bf16.mxu0 %v1304
        %1622 = vmatpush1.bf16.msra.mxu0 %v1303
        %1623 = vmatprep.subr.bf16.mxu0 %v1308
        %1624 = vmatpush1.bf16.msra.mxu0 %v1307
        %1625 = vmatprep.subr.bf16.mxu0 %v1312
        %1626 = vmatpush1.bf16.msra.mxu0 %v1311
        %1627 = vmatprep.subr.bf16.mxu0 %v1316
        %1628 = vmatpush1.bf16.msra.mxu0 %v1315
        %1629 = vmatprep.mubr.bf16.mxu0 %v336
        %1630 = vmatmul.mubr.bf16.gmra.mrb[0].mxu0 %v335
        %v1631 = vpop.f32.mrb[0].mxu0
        %v1632 = vadd.f32 %v1589, %v1631
        %v1633 = vpop.f32.mrb[0].mxu0
        %v1634 = vadd.f32 %v1591, %v1633
        %v1635 = vpop.f32.mrb[0].mxu0
        %v1636 = vadd.f32 %v1593, %v1635
        %v1637 = vpop.f32.mrb[0].mxu0
        %v1638 = vadd.f32 %v1595, %v1637
        %1639 = vdwg.mxu0
        %1640 = vmatprep.subr.bf16.mxu0 %v1130
        %1641 = vmatpush1.bf16.msra.mxu0 %v1129
        %1642 = vmatprep.subr.bf16.mxu0 %v1134
        %1643 = vmatpush1.bf16.msra.mxu0 %v1133
        %1644 = vmatprep.subr.bf16.mxu0 %v1138
        %1645 = vmatpush1.bf16.msra.mxu0 %v1137
        %1646 = vmatprep.subr.bf16.mxu0 %v1142
        %1647 = vmatpush1.bf16.msra.mxu0 %v1141
        %1648 = vmatprep.subr.bf16.mxu0 %v1146
        %1649 = vmatpush1.bf16.msra.mxu0 %v1145
        %1650 = vmatprep.subr.bf16.mxu0 %v1150
        %1651 = vmatpush1.bf16.msra.mxu0 %v1149
        %1652 = vmatprep.subr.bf16.mxu0 %v1154
        %1653 = vmatpush1.bf16.msra.mxu0 %v1153
        %1654 = vmatprep.subr.bf16.mxu0 %v1158
        %1655 = vmatpush1.bf16.msra.mxu0 %v1157
        %1656 = vmatprep.subr.bf16.mxu0 %v1162
        %1657 = vmatpush1.bf16.msra.mxu0 %v1161
        %1658 = vmatprep.subr.bf16.mxu0 %v1166
        %1659 = vmatpush1.bf16.msra.mxu0 %v1165
        %1660 = vmatprep.subr.bf16.mxu0 %v1170
        %1661 = vmatpush1.bf16.msra.mxu0 %v1169
        %1662 = vmatprep.subr.bf16.mxu0 %v1174
        %1663 = vmatpush1.bf16.msra.mxu0 %v1173
        %1664 = vmatprep.subr.bf16.mxu0 %v1178
        %1665 = vmatpush1.bf16.msra.mxu0 %v1177
        %1666 = vmatprep.subr.bf16.mxu0 %v1182
        %1667 = vmatpush1.bf16.msra.mxu0 %v1181
        %1668 = vmatprep.subr.bf16.mxu0 %v1186
        %1669 = vmatpush1.bf16.msra.mxu0 %v1185
        %1670 = vmatprep.subr.bf16.mxu0 %v1190
        %1671 = vmatpush1.bf16.msra.mxu0 %v1189
        %1672 = vmatprep.mubr.bf16.mxu0 %v332
        %1673 = vmatmul.mubr.bf16.gmra.mrb[0].mxu0 %v331
        %v1674 = vpop.f32.mrb[0].mxu0
        %v1675 = vadd.f32 %v542, %v1674
        %v1676 = vpop.f32.mrb[0].mxu0
        %v1677 = vadd.f32 %v546, %v1676
        %v1678 = vpop.f32.mrb[0].mxu0
        %v1679 = vadd.f32 %v542, %v1678
        %v1680 = vpop.f32.mrb[0].mxu0
        %v1681 = vadd.f32 %v546, %v1680
        %1682 = vdwg.mxu0
        %1683 = vmatprep.subr.bf16.mxu0 %v1194
        %1684 = vmatpush1.bf16.msra.mxu0 %v1193
        %1685 = vmatprep.subr.bf16.mxu0 %v1198
        %1686 = vmatpush1.bf16.msra.mxu0 %v1197
        %1687 = vmatprep.subr.bf16.mxu0 %v1202
        %1688 = vmatpush1.bf16.msra.mxu0 %v1201
        %1689 = vmatprep.subr.bf16.mxu0 %v1206
        %1690 = vmatpush1.bf16.msra.mxu0 %v1205
        %1691 = vmatprep.subr.bf16.mxu0 %v1210
        %1692 = vmatpush1.bf16.msra.mxu0 %v1209
        %1693 = vmatprep.subr.bf16.mxu0 %v1214
        %1694 = vmatpush1.bf16.msra.mxu0 %v1213
        %1695 = vmatprep.subr.bf16.mxu0 %v1218
        %1696 = vmatpush1.bf16.msra.mxu0 %v1217
        %1697 = vmatprep.subr.bf16.mxu0 %v1222
        %1698 = vmatpush1.bf16.msra.mxu0 %v1221
        %1699 = vmatprep.subr.bf16.mxu0 %v1226
        %1700 = vmatpush1.bf16.msra.mxu0 %v1225
        %1701 = vmatprep.subr.bf16.mxu0 %v1230
        %1702 = vmatpush1.bf16.msra.mxu0 %v1229
        %1703 = vmatprep.subr.bf16.mxu0 %v1234
        %1704 = vmatpush1.bf16.msra.mxu0 %v1233
        %1705 = vmatprep.subr.bf16.mxu0 %v1238
        %1706 = vmatpush1.bf16.msra.mxu0 %v1237
        %1707 = vmatprep.subr.bf16.mxu0 %v1242
        %1708 = vmatpush1.bf16.msra.mxu0 %v1241
        %1709 = vmatprep.subr.bf16.mxu0 %v1246
        %1710 = vmatpush1.bf16.msra.mxu0 %v1245
        %1711 = vmatprep.subr.bf16.mxu0 %v1250
        %1712 = vmatpush1.bf16.msra.mxu0 %v1249
        %1713 = vmatprep.subr.bf16.mxu0 %v1254
        %1714 = vmatpush1.bf16.msra.mxu0 %v1253
        %1715 = vmatprep.mubr.bf16.mxu0 %v334
        %1716 = vmatmul.mubr.bf16.gmra.mrb[0].mxu0 %v333
        %v1717 = vpop.f32.mrb[0].mxu0
        %v1718 = vadd.f32 %v1675, %v1717
        %v1719 = vpop.f32.mrb[0].mxu0
        %v1720 = vadd.f32 %v1677, %v1719
        %v1721 = vpop.f32.mrb[0].mxu0
        %v1722 = vadd.f32 %v1679, %v1721
        %v1723 = vpop.f32.mrb[0].mxu0
        %v1724 = vadd.f32 %v1681, %v1723
        %1725 = vdwg.mxu0
        %1726 = vmatprep.subr.bf16.mxu0 %v1258
        %1727 = vmatpush1.bf16.msra.mxu0 %v1257
        %1728 = vmatprep.subr.bf16.mxu0 %v1262
        %1729 = vmatpush1.bf16.msra.mxu0 %v1261
        %1730 = vmatprep.subr.bf16.mxu0 %v1266
        %1731 = vmatpush1.bf16.msra.mxu0 %v1265
        %1732 = vmatprep.subr.bf16.mxu0 %v1270
        %1733 = vmatpush1.bf16.msra.mxu0 %v1269
        %1734 = vmatprep.subr.bf16.mxu0 %v1274
        %1735 = vmatpush1.bf16.msra.mxu0 %v1273
        %1736 = vmatprep.subr.bf16.mxu0 %v1278
        %1737 = vmatpush1.bf16.msra.mxu0 %v1277
        %1738 = vmatprep.subr.bf16.mxu0 %v1282
        %1739 = vmatpush1.bf16.msra.mxu0 %v1281
        %1740 = vmatprep.subr.bf16.mxu0 %v1286
        %1741 = vmatpush1.bf16.msra.mxu0 %v1285
        %1742 = vmatprep.subr.bf16.mxu0 %v1290
        %1743 = vmatpush1.bf16.msra.mxu0 %v1289
        %1744 = vmatprep.subr.bf16.mxu0 %v1294
        %1745 = vmatpush1.bf16.msra.mxu0 %v1293
        %1746 = vmatprep.subr.bf16.mxu0 %v1298
        %1747 = vmatpush1.bf16.msra.mxu0 %v1297
        %1748 = vmatprep.subr.bf16.mxu0 %v1302
        %1749 = vmatpush1.bf16.msra.mxu0 %v1301
        %1750 = vmatprep.subr.bf16.mxu0 %v1306
        %1751 = vmatpush1.bf16.msra.mxu0 %v1305
        %1752 = vmatprep.subr.bf16.mxu0 %v1310
        %1753 = vmatpush1.bf16.msra.mxu0 %v1309
        %1754 = vmatprep.subr.bf16.mxu0 %v1314
        %1755 = vmatpush1.bf16.msra.mxu0 %v1313
        %1756 = vmatprep.subr.bf16.mxu0 %v1318
        %1757 = vmatpush1.bf16.msra.mxu0 %v1317
        %1758 = vmatprep.mubr.bf16.mxu0 %v336
        %1759 = vmatmul.mubr.bf16.gmra.mrb[0].mxu0 %v335
        %v1760 = vpop.f32.mrb[0].mxu0
        %v1761 = vadd.f32 %v1718, %v1760
        %v1762 = vpop.f32.mrb[0].mxu0
        %v1763 = vadd.f32 %v1720, %v1762
        %v1764 = vpop.f32.mrb[0].mxu0
        %v1765 = vadd.f32 %v1722, %v1764
        %v1766 = vpop.f32.mrb[0].mxu0
        %v1767 = vadd.f32 %v1724, %v1766
        %1768 = vdwg.mxu0
        %v1769 = vtanh.pop %v1632
        %v1770 = vtanh.pop %v1634
        %v1771 = vtanh.pop %v1761
        %v1772 = vtanh.pop %v1763
        %v1773 = vtanh.pop %v1636
        %v1774 = vtanh.pop %v1638
        %v1775 = vtanh.pop %v1765
        %v1776 = vtanh.pop %v1767
        %v1777 = vld [vmem:[%s3] sm:$0xf]
        %v1779 = vlaneseq
        %v1780 = vshrl.u32 %v1779, 7
        %v1781 = vsub.s32 0, %v1780
        %v1782 = vrot.slane %v1777, %v1781
        %v1783 = vlaneseq
        %v1784 = vshrl.u32 %v1783, 7
        %v1785 = vsub.s32 1, %v1784
        %v1786 = vrot.slane %v1777, %v1785
        %v1787 = vlaneseq
        %v1788 = vshrl.u32 %v1787, 7
        %v1789 = vsub.s32 2, %v1788
        %v1790 = vrot.slane %v1777, %v1789
        %v1791 = vlaneseq
        %v1792 = vshrl.u32 %v1791, 7
        %v1793 = vsub.s32 3, %v1792
        %v1794 = vrot.slane %v1777, %v1793
        %v1799 = vmul.f32 %v1769, %v1782
        %v1800 = vmul.f32 %v1770, %v1786
        %v1801 = vmul.f32 %v1771, %v1790
        %v1802 = vmul.f32 %v1772, %v1794
        %v1803 = vmul.f32 %v1773, %v1782
        %v1804 = vmul.f32 %v1774, %v1786
        %v1805 = vmul.f32 %v1775, %v1790
        %v1806 = vmul.f32 %v1776, %v1794
        %v1807 = vadd.f32 %v1799, %v1800
        %v1808 = vadd.f32 %v1807, %v1801
        %v1809 = vadd.f32 %v1808, %v1802
        %1810 = vadd.xlane.f32.xlu0 %v1809
        %v1811 = vpop.xlane.xlu0 %1810
        %v1812 = vadd.f32 %v1803, %v1804
        %v1813 = vadd.f32 %v1812, %v1805
        %v1814 = vadd.f32 %v1813, %v1806
        %1815 = vadd.xlane.f32.xlu0 %v1814
        %v1816 = vpop.xlane.xlu0 %1815
        %v1817 = vld [vmem:[#allocation2] sm:$0x1]
        %v1819 = vlaneseq
        %v1820 = vshrl.u32 %v1819, 7
        %v1821 = vsub.s32 0, %v1820
        %v1822 = vrot.slane %v1817, %v1821
        %v1824 = vadd.f32 %v1811, %v1822
        %v1825 = vadd.f32 %v1816, %v1822
        %vm1826 = vcmask 7168
        %v1827 = vsel %vm1826, %v1824, -inf
        %v1828 = vrot.slane %v1827, 4
        %v1829 = vmax.f32 %v1827, %v1828
        %v1830 = vrot.slane %v1829, 2
        %v1831 = vmax.f32 %v1829, %v1830
        %v1832 = vrot.slane %v1831, 1
        %v1833 = vmax.f32 %v1831, %v1832
        %v1834 = vsel %vm1826, %v1825, -inf
        %v1835 = vrot.slane %v1834, 4
        %v1836 = vmax.f32 %v1834, %v1835
        %v1837 = vrot.slane %v1836, 2
        %v1838 = vmax.f32 %v1836, %v1837
        %v1839 = vrot.slane %v1838, 1
        %v1840 = vmax.f32 %v1838, %v1839
        %v1841 = vsub.f32 %v1824, %v1833
        %v1842 = vsub.f32 %v1825, %v1840
        %v1843 = vmul.f32 %v1841, 1.442695
        %v1844 = vpow.pop %v1843
        %v1845 = vmul.f32 %v1842, 1.442695
        %v1846 = vpow.pop %v1845
        %v1847 = vsel %vm1826, %v1844, 0.0
        %v1848 = vrot.slane %v1847, 4
        %v1849 = vadd.f32 %v1847, %v1848
        %v1850 = vrot.slane %v1849, 2
        %v1851 = vadd.f32 %v1849, %v1850
        %v1852 = vrot.slane %v1851, 1
        %v1853 = vadd.f32 %v1851, %v1852
        %v1854 = vsel %vm1826, %v1846, 0.0
        %v1855 = vrot.slane %v1854, 4
        %v1856 = vadd.f32 %v1854, %v1855
        %v1857 = vrot.slane %v1856, 2
        %v1858 = vadd.f32 %v1856, %v1857
        %v1859 = vrot.slane %v1858, 1
        %v1860 = vadd.f32 %v1858, %v1859
        %v1861 = vrcp.pop %v1853
        %v1862 = vrcp.pop %v1860
        %v1863 = vmul.f32 %v1844, %v1861
        %v1864 = vmul.f32 %v1846, %v1862
        %v1865 = vld [vmem:[%s5] sm:$0x3f]
        %v1867 = vlaneseq
        %v1868 = vshrl.u32 %v1867, 7
        %v1869 = vsub.s32 0, %v1868
        %v1870 = vrot.slane %v1865, %v1869
        %v1871 = vlaneseq
        %v1872 = vshrl.u32 %v1871, 7
        %v1873 = vsub.s32 1, %v1872
        %v1874 = vrot.slane %v1865, %v1873
        %v1875 = vlaneseq
        %v1876 = vshrl.u32 %v1875, 7
        %v1877 = vsub.s32 2, %v1876
        %v1878 = vrot.slane %v1865, %v1877
        %v1879 = vlaneseq
        %v1880 = vshrl.u32 %v1879, 7
        %v1881 = vsub.s32 3, %v1880
        %v1882 = vrot.slane %v1865, %v1881
        %v1883 = vlaneseq
        %v1884 = vshrl.u32 %v1883, 7
        %v1885 = vsub.s32 4, %v1884
        %v1886 = vrot.slane %v1865, %v1885
        %v1887 = vlaneseq
        %v1888 = vshrl.u32 %v1887, 7
        %v1889 = vsub.s32 5, %v1888
        %v1890 = vrot.slane %v1865, %v1889
        %v1897 = vmul.f32 %v319, %v1870
        %v1898 = vmul.f32 %v320, %v1874
        %v1899 = vmul.f32 %v321, %v1878
        %v1900 = vmul.f32 %v322, %v1882
        %v1901 = vmul.f32 %v323, %v1886
        %v1902 = vmul.f32 %v324, %v1890
        %v1903 = vmul.f32 %v325, %v1870
        %v1904 = vmul.f32 %v326, %v1874
        %v1905 = vmul.f32 %v327, %v1878
        %v1906 = vmul.f32 %v328, %v1882
        %v1907 = vmul.f32 %v329, %v1886
        %v1908 = vmul.f32 %v330, %v1890
        %v1909 = vadd.f32 %v1897, %v1898
        %v1910 = vadd.f32 %v1909, %v1899
        %v1911 = vadd.f32 %v1910, %v1900
        %v1912 = vadd.f32 %v1911, %v1901
        %v1913 = vadd.f32 %v1912, %v1902
        %1914 = vadd.xlane.f32.xlu0 %v1913
        %v1915 = vpop.xlane.xlu0 %1914
        %v1916 = vadd.f32 %v1903, %v1904
        %v1917 = vadd.f32 %v1916, %v1905
        %v1918 = vadd.f32 %v1917, %v1906
        %v1919 = vadd.f32 %v1918, %v1907
        %v1920 = vadd.f32 %v1919, %v1908
        %1921 = vadd.xlane.f32.xlu0 %v1920
        %v1922 = vpop.xlane.xlu0 %1921
        %v1923 = vmul.f32 %v1863, %v1915
        %v1924 = vmul.f32 %v1864, %v1922
        %v1925 = vsel %vm1826, %v1923, 0.0
        %v1926 = vrot.slane %v1925, 4
        %v1927 = vadd.f32 %v1925, %v1926
        %v1928 = vrot.slane %v1927, 2
        %v1929 = vadd.f32 %v1927, %v1928
        %v1930 = vrot.slane %v1929, 1
        %v1931 = vadd.f32 %v1929, %v1930
        %v1932 = vsel %vm1826, %v1924, 0.0
        %v1933 = vrot.slane %v1932, 4
        %v1934 = vadd.f32 %v1932, %v1933
        %v1935 = vrot.slane %v1934, 2
        %v1936 = vadd.f32 %v1934, %v1935
        %v1937 = vrot.slane %v1936, 1
        %v1938 = vadd.f32 %v1936, %v1937
        %v1939 = vld [vmem:[#allocation3] sm:$0x1]
        %v1940 = vadd.f32 %v1931, %v1939
        %v1941 = vadd.f32 %v1938, %v1939
        %vm1942 = vcmask 0
        %1943 = vst.msk [vmem:[%s317] sm:$0x1] %vm1942, %v1940
        %1944 = vst.msk [vmem:[%s317 + $0x1] sm:$0x1] %vm1942, %v1941
        %s1945 = smul.u32 2, %s26
        %p1946 = scmp.lt.s32.totalorder %s1945, 3
        %s1947 = scalar_select %p1946, %s1945, 3
        %s1948 = scalar_lea.vmem %s7, %s1947
        // Predicated region
        $region57: #{tpu_custom_call.1} parent=47 // pred_check
          %p1949 = pneg %p196
        $region58: #{tpu_custom_call.1} parent=47 // pred_check_branch
          %1951 = sbr.rel (%p1949) target = $region60
        $region59: #{tpu_custom_call.1} parent=47 // pred_region
          %s1952 = smul.u32 2, %s26
        $region60: #{tpu_custom_call.1} parent=47 // pred_fallthru
          _
      $region48: #{tpu_custom_call.1} parent=5 // pred_fallthru
        _
      %p1953 = scmp.le.s32.totalorder 2, %s21
      // Predicated region
      $region61: #{tpu_custom_call.1} parent=5 // pred_check
        %p1954 = pneg %p1953
      $region62: #{tpu_custom_call.1} parent=5 // pred_check_branch
        %1956 = sbr.rel (%p1954) target = $region64
      $region63: #{tpu_custom_call.1} parent=5 // pred_region
        %s1957 = ssub.s32 %s21, 2
        // Predicated region
        $region65: #{tpu_custom_call.1} parent=63 // pred_check
          %p1958 = pneg %p202
        $region66: #{tpu_custom_call.1} parent=63 // pred_check_branch
          %1960 = sbr.rel (%p1958) target = $region68
        $region67: #{tpu_custom_call.1} parent=63 // pred_region
          %s1961 = smul.u32 2, %s27
          %p1962 = scmp.lt.s32.totalorder %s1961, 3
          %s1963 = scalar_select %p1962, %s1961, 3
          %s1964 = scalar_lea.vmem %s7, %s1963
        $region68: #{tpu_custom_call.1} parent=63 // pred_fallthru
          _
      $region64: #{tpu_custom_call.1} parent=5 // pred_fallthru
        _
    $region6: #{tpu_custom_call.1} parent=1 // loop_footer
      %s25 = sadd.s32 1, %s21
    $region7: #{tpu_custom_call.1} parent=1 // loop_footer_branch
      %20 = sbr.rel target = $region3
    $region8: #{tpu_custom_call.1} parent=1 // loop_exit
      _
    %1965 = vsyncpa [#allocation5], 1
    %s1966 = scalar_lea.sflag [#allocation5], 1
    %1967 = vsyncpa %s1966, 1
    %1968 = vsyncpa [#allocation7], 1

</llo_original>
